<compile_context>
chip_gen: v7x
topology: tpu7x:2x2x1
jax: 0.10.0
libtpu: 0.0.40
codegen_flags: <defaults>
</compile_context>

<pallas_src>
import jax
import jax.numpy as jnp
from jax.experimental import pallas as pl
from jax.experimental.pallas import tpu as pltpu

# Keep host-side folds and the pure-JAX reference in full f32 (avoid bf16 matmul demotion).
jax.config.update("jax_default_matmul_precision", "highest")


def _round_up(x, k):
    return ((x + k - 1) // k) * k


# ----------------------------------------------------------------------------------
# Layout of the packed carry / weight slab / packed output
# ----------------------------------------------------------------------------------
def _make_layout(n, m, n_xi, l, hidden):
    lay = {}
    # carry / fused-matmul LHS lanes: [x_ | xi | x_old | u_old | 1 | 0...]
    lay["S_X"] = 0
    lay["S_XI"] = n
    lay["S_XOLD"] = n + n_xi
    lay["S_UOLD"] = n + n_xi + n
    lay["S_ONE"] = n + n_xi + n + m
    lay["STATE_COLS"] = _round_up(max(lay["S_ONE"] + 1, 128), 128)
    # fused-matmul output columns: [v*invLambda | xi_lin | y_lin | ... | h_lin]
    lay["SLAB_COLS"] = 128
    lay["V_OFF"] = 0
    lay["XI_OFF"] = l
    lay["Y_OFF"] = l + n_xi
    h_off = lay["SLAB_COLS"] - _round_up(hidden, 8)
    h_off = max(h_off, _round_up(lay["Y_OFF"] + m, 8))
    lay["H_OFF"] = h_off
    assert lay["H_OFF"] + hidden <= lay["SLAB_COLS"], "hidden too large for 128-lane slab"
    # slab row blocks
    lay["BIG_ROW"] = 0
    lay["LOOP_ROW"] = lay["BIG_ROW"] + lay["STATE_COLS"]
    lay["W2_ROW"] = lay["LOOP_ROW"] + _round_up(l, 8)
    lay["MISC_ROW"] = lay["W2_ROW"] + _round_up(hidden, 8)
    lay["SLAB_ROWS"] = _round_up(lay["MISC_ROW"] + 1, 8)
    # per-step measurement input lanes (x_ in [0:n])
    lay["X_COLS"] = 128
    # packed output lanes: [u | xi_new | delta | 0...]
    lay["O_U"] = 0
    lay["O_XI"] = m
    lay["O_D"] = m + n_xi
    lay["OUT_COLS"] = 128
    assert lay["O_D"] + 1 <= lay["OUT_COLS"]
    return lay


# ----------------------------------------------------------------------------------
# Pallas kernel (one grid step == one controller time step, batched over sublane rows)
# ----------------------------------------------------------------------------------
def _build_kernel(n, m, n_xi, l, hidden, lay):
    f32 = jnp.float32
    S_X, S_XI = lay["S_X"], lay["S_XI"]
    S_XOLD, S_UOLD = lay["S_XOLD"], lay["S_UOLD"]
    V, XO, YO, HO = lay["V_OFF"], lay["XI_OFF"], lay["Y_OFF"], lay["H_OFF"]

    def controller_kernel(x_ref, init_ref, slab_ref, out_ref, carry_ref):
        # t == 0: load the initial carried state [0 | xi0 | x_old0 | u_old0 | 1 | 0...].
        @pl.when(pl.program_id(0) == 0)
        def _():
            carry_ref[...] = init_ref[...]

        x_t = x_ref[0][:, 0:n]                           # (B, n) current measurement
        carry_ref[:, S_X:S_X + n] = x_t                  # place into its vec slot

        # ONE fused matmul.  psi (NoiseReconstruction), E^-1, 1/Lambda, and b1 are all
        # folded into the slab on the host:
        #   [x_ | xi | x_old | u_old | 1] @ M -> [v*invLambda | xi_lin | y_lin | .. | h_lin]
        vec = carry_ref[...]                             # (B, STATE_COLS)
        acc = jnp.dot(
            vec, slab_ref[lay["BIG_ROW"]:lay["BIG_ROW"] + lay["STATE_COLS"], :],
            preferred_element_type=f32)                  # (B, 128)

        # Sequential epsilon recursion (D11 strictly lower triangular, 1/Lambda folded).
        # Each step: single lane extract -> tanh -> one full-width broadcast-FMA that
        # updates the remaining v columns (D11 term) and the xi columns (B1 term) at once.
        lrows = slab_ref[lay["LOOP_ROW"]:lay["LOOP_ROW"] + l, :]   # (l, 128)
        for i in range(l):
            e_i = jnp.tanh(acc[:, V + i:V + i + 1])
            acc = acc + e_i * lrows[i:i + 1, :]

        xi_new = acc[:, XO:XO + n_xi]                    # xi@(EinvF).T + w@(EinvB2).T + eps@(EinvB1).T
        u = 8.0 + (12.8 - 8.0) * jax.nn.sigmoid(acc[:, YO:YO + m])   # D21 == 0 term dropped

        # BinaryClassifier head on the reconstructed noise w.
        # TODO(synk): BinaryClassifier is not defined in the reference source; assumed
        # Linear(n, hidden) -> ReLU -> Linear(hidden, 1) -> Sigmoid.
        h = jnp.maximum(acc[:, HO:HO + hidden], 0.0)     # w@W1.T + b1 (b1 via constant-1 lane)
        logits = jnp.dot(h, slab_ref[lay["W2_ROW"]:lay["W2_ROW"] + hidden, :],
                         preferred_element_type=f32)     # only column 0 is live
        b2 = slab_ref[lay["MISC_ROW"]:lay["MISC_ROW"] + 1, 0:1]
        delta = jax.nn.sigmoid(logits[:, 0:1] + b2)

        # Single lane-dense packed store: [u | xi_new | delta | 0...]
        pad = lay["OUT_COLS"] - (m + n_xi + 1)
        out_ref[0] = jnp.concatenate(
            [u, xi_new, delta, jnp.zeros((u.shape[0], pad), f32)], axis=1)

        # Carry for step t+1: xi <- xi_new, omega <- (x_t, u_t).
        carry_ref[:, S_XI:S_XI + n_xi] = xi_new
        carry_ref[:, S_XOLD:S_XOLD + n] = x_t
        carry_ref[:, S_UOLD:S_UOLD + m] = u

    return controller_kernel


# ----------------------------------------------------------------------------------
# RenG.set_param (mode='l2stable') -- one-time host-side parameter construction
# ----------------------------------------------------------------------------------
def reng_set_param(raw, m, p, n, l, gamma=1.0, eps=1e-3):
    X, Y, Z3, X3, Y3 = raw["X"], raw["Y"], raw["Z3"], raw["X3"], raw["Y3"]
    D12, B2, C2 = raw["D12"], raw["B2"], raw["C2"]

    Q = -(1.0 / gamma) * jnp.eye(p)
    R = gamma * jnp.eye(m)
    S = jnp.zeros((m, p))

    mn = min(p, m)
    M = X3.T @ X3 + Y3 - Y3.T + Z3.T @ Z3 + eps * jnp.eye(mn)
    if p >= m:
        inv_ipm = jnp.linalg.inv(jnp.eye(m) + M)
        N = jnp.vstack([(jnp.eye(m) - M) @ inv_ipm, -2.0 * Z3 @ inv_ipm])
    else:
        inv_ipm = jnp.linalg.inv(jnp.eye(p) + M)
        N = jnp.hstack([inv_ipm @ (jnp.eye(p) - M), -2.0 * inv_ipm @ Z3.T])

    Lq = jnp.linalg.cholesky(-Q).T
    Lr = jnp.linalg.cholesky(R - S @ jnp.linalg.inv(Q) @ S.T).T
    D22 = -jnp.linalg.inv(Q) @ S.T + jnp.linalg.inv(Lq) @ (N @ Lr)

    R_cal = R + S @ D22 + (S @ D22).T + D22.T @ Q @ D22
    R_cal_inv = jnp.linalg.inv(R_cal)

    D21 = jnp.zeros((p, l))   # zero in set_param; the eps@D21.T output term is dropped.
    C2_cal = ((D22.T @ Q + S) @ C2).T
    D21_cal = ((D22.T @ Q + S) @ D21).T - D12
    vec_r = jnp.concatenate([C2_cal, D21_cal, B2], axis=0)
    psi_r = vec_r @ R_cal_inv @ vec_r.T
    vec_q = jnp.concatenate([C2.T, D21.T, jnp.zeros((n, p))], axis=0)
    psi_q = vec_q @ Q @ vec_q.T

    H = X.T @ X + eps * jnp.eye(2 * n + l) + psi_r - psi_q
    H11 = H[:n, :n]
    H21 = H[n:n + l, :n]
    H22 = H[n:n + l, n:n + l]
    H31 = H[n + l:, :n]
    H32 = H[n + l:, n:n + l]
    H33 = H[n + l:, n + l:]

    P_cal = H33
    Fm = H31
    B1 = H32
    E = 0.5 * (H11 + P_cal + Y - Y.T)
    Lambda = 0.5 * jnp.diag(H22)
    D11 = -jnp.tril(H22, -1)
    C1 = -H21
    Einv = jnp.linalg.inv(E)

    return dict(F=Fm, B1=B1, B2=B2, Einv=Einv, C1=C1, D11=D11, D12=D12,
                Lambda=Lambda, C2=C2, D22=D22)


# ----------------------------------------------------------------------------------
# Weight slab (pre-transposed, psi / Einv / 1/Lambda / b1 folded on the host)
# ----------------------------------------------------------------------------------
def _build_slab(p, lay, n, m, n_xi, l, hidden):
    f32 = jnp.float32
    Einv = p["Einv"]
    Ff = Einv @ p["F"]
    B1f = Einv @ p["B1"]
    B2f = Einv @ p["B2"]
    invlam = (1.0 / p["Lambda"]).astype(f32)             # (l,)

    COLS = lay["SLAB_COLS"]
    V, XO, YO, HO = lay["V_OFF"], lay["XI_OFF"], lay["Y_OFF"], lay["H_OFF"]

    # w-linear block (rows for x_): columns [v*invLambda | xi_lin | y | h]
    Mw = jnp.zeros((n, COLS), f32)
    Mw = Mw.at[:, V:V + l].set(p["D12"].T * invlam[None, :])
    Mw = Mw.at[:, XO:XO + n_xi].set(B2f.T)
    Mw = Mw.at[:, YO:YO + m].set(p["D22"].T)
    Mw = Mw.at[:, HO:HO + hidden].set(p["W1"].T)

    # xi-linear block
    Mxi = jnp.zeros((n_xi, COLS), f32)
    Mxi = Mxi.at[:, V:V + l].set(p["C1"].T * invlam[None, :])
    Mxi = Mxi.at[:, XO:XO + n_xi].set(Ff.T)
    Mxi = Mxi.at[:, YO:YO + m].set(p["C2"].T)

    # fused matmul weight, rows indexed by the carry lanes [x_ | xi | x_old | u_old | 1]
    big = jnp.zeros((lay["STATE_COLS"], COLS), f32)
    big = big.at[lay["S_X"]:lay["S_X"] + n, :].set(Mw)
    big = big.at[lay["S_XI"]:lay["S_XI"] + n_xi, :].set(Mxi)
    big = big.at[lay["S_XOLD"]:lay["S_XOLD"] + n, :].set(-(p["A_f"].T @ Mw))   # psi fold
    big = big.at[lay["S_UOLD"]:lay["S_UOLD"] + m, :].set(-(p["B_f"].T @ Mw))   # psi fold
    big = big.at[lay["S_ONE"], HO:HO + hidden].set(p["b1"][0])                 # b1 fold

    # per-step loop rows: e_i * row updates both the remaining v columns (D11*invLambda)
    # and the xi columns (Einv B1) in one broadcast-FMA; zeros elsewhere.
    loop_rows = jnp.zeros((l, COLS), f32)
    loop_rows = loop_rows.at[:, V:V + l].set(p["D11"].T * invlam[None, :])
    loop_rows = loop_rows.at[:, XO:XO + n_xi].set(B1f.T)

    slab = jnp.zeros((lay["SLAB_ROWS"], COLS), f32)
    slab = slab.at[lay["BIG_ROW"]:lay["BIG_ROW"] + lay["STATE_COLS"], :].set(big)
    slab = slab.at[lay["LOOP_ROW"]:lay["LOOP_ROW"] + l, :].set(loop_rows)
    slab = slab.at[lay["W2_ROW"]:lay["W2_ROW"] + hidden, 0:1].set(p["W2"].T)
    slab = slab.at[lay["MISC_ROW"], 0].set(p["b2"][0, 0])
    return slab


# ----------------------------------------------------------------------------------
# Plain-JAX reference of one Controller.forward step (for validation)
# ----------------------------------------------------------------------------------
def reference_step(p, x_, xi, x_old, u_old):
    psi = x_old @ p["A_f"].T + u_old @ p["B_f"].T
    w = x_ - psi
    l = p["C1"].shape[0]
    B = x_.shape[0]
    eps = jnp.zeros((B, l), jnp.float32)
    for i in range(l):
        v = (xi @ p["C1"][i, :].reshape(-1, 1)
             + eps @ p["D11"][i, :].reshape(-1, 1)
             + w @ p["D12"][i, :].reshape(-1, 1))
        eps = eps.at[:, i].set(jnp.tanh(v[:, 0] / p["Lambda"][i]))
    e_x = xi @ p["F"].T + eps @ p["B1"].T + w @ p["B2"].T
    xi_new = e_x @ p["Einv"].T
    y = xi @ p["C2"].T + w @ p["D22"].T          # D21 == 0
    u = 8.0 + (12.8 - 8.0) * jax.nn.sigmoid(y)
    h = jnp.maximum(w @ p["W1"].T + p["b1"], 0.0)
    delta = jax.nn.sigmoid(h @ p["W2"].T + p["b2"])
    return u, xi_new, delta


# ----------------------------------------------------------------------------------
# Controller wrapper
# ----------------------------------------------------------------------------------
class ControllerPallas:
    """Pallas implementation of Controller.forward (single step and T-step rollout)."""

    def __init__(self, n, m, n_xi, l, hidden=64, seed=0):
        self.n, self.m, self.n_xi, self.l, self.hidden = n, m, n_xi, l, hidden
        key = jax.random.PRNGKey(seed)
        ks = jax.random.split(key, 12)
        std = 1.0

        # RenG(m=n, p=m, n=n_xi, l) -- note the argument shuffle in Controller.__init__
        m_ren, p_ren = n, m
        mn = min(p_ren, m_ren)
        raw = dict(
            X=jax.random.normal(ks[0], (2 * n_xi + l, 2 * n_xi + l)) * std,
            Y=jax.random.normal(ks[1], (n_xi, n_xi)) * std,
            Z3=jax.random.normal(ks[2], (abs(p_ren - m_ren), mn)) * std,
            X3=jax.random.normal(ks[3], (mn, mn)) * std,
            Y3=jax.random.normal(ks[4], (mn, mn)) * std,
            D12=jax.random.normal(ks[5], (l, m_ren)),
            B2=jax.random.normal(ks[6], (n_xi, m_ren)) * std,
            C2=jax.random.normal(ks[7], (p_ren, n_xi)) * std,
        )
        ren = reng_set_param(raw, m_ren, p_ren, n_xi, l, gamma=1.0)

        # NoiseReconstruction dynamics f(t, x, u) = x@A.T + u@B.T (user-supplied LTI model).
        # TODO(synk): f is supplied externally in the reference code; an LTI model is assumed.
        A_f = jax.random.normal(ks[8], (n, n)) * 0.1
        B_f = jax.random.normal(ks[9], (n, m)) * 0.1
        # BinaryClassifier(n, 64) params (assumed MLP, see TODO in kernel).
        W1 = jax.random.normal(ks[10], (hidden, n)) / jnp.sqrt(n)
        b1 = jnp.zeros((1, hidden))
        W2 = jax.random.normal(ks[11], (1, hidden)) / jnp.sqrt(hidden)
        b2 = jnp.zeros((1, 1))

        self.params = {k: jnp.asarray(v, jnp.float32) for k, v in
                       dict(A_f=A_f, B_f=B_f, W1=W1, b1=b1, W2=W2, b2=b2, **ren).items()}

        self.lay = _make_layout(n, m, n_xi, l, hidden)
        self.slab = _build_slab(self.params, self.lay, n, m, n_xi, l, hidden)
        self._kernel = _build_kernel(n, m, n_xi, l, hidden, self.lay)
        self._rollout_jit = jax.jit(self._rollout_impl)

    # --- T-step closed-loop rollout, batched over B controller instances, in ONE pallas_call
    def _rollout_impl(self, x_seq, xi0, x_old0, u_old0, slab):
        lay, n, m, n_xi = self.lay, self.n, self.m, self.n_xi
        f32 = jnp.float32
        T, B = x_seq.shape[0], x_seq.shape[1]
        Bp = max(_round_up(B, 8), 8)

        xs = jnp.zeros((T, Bp, lay["X_COLS"]), f32)
        xs = xs.at[:, :B, 0:n].set(x_seq.astype(f32))

        init = jnp.zeros((Bp, lay["STATE_COLS"]), f32)
        init = init.at[:B, lay["S_XI"]:lay["S_XI"] + n_xi].set(xi0.astype(f32))
        init = init.at[:B, lay["S_XOLD"]:lay["S_XOLD"] + n].set(x_old0.astype(f32))
        init = init.at[:B, lay["S_UOLD"]:lay["S_UOLD"] + m].set(u_old0.astype(f32))
        init = init.at[:, lay["S_ONE"]].set(1.0)

        out = pl.pallas_call(
            self._kernel,
            out_shape=jax.ShapeDtypeStruct((T, Bp, lay["OUT_COLS"]), f32),
            grid_spec=pltpu.PrefetchScalarGridSpec(
                num_scalar_prefetch=0,
                grid=(T,),
                in_specs=[
                    pl.BlockSpec((1, Bp, lay["X_COLS"]), lambda t: (t, 0, 0)),
                    pl.BlockSpec((Bp, lay["STATE_COLS"]), lambda t: (0, 0)),
                    pl.BlockSpec((lay["SLAB_ROWS"], lay["SLAB_COLS"]), lambda t: (0, 0)),
                ],
                out_specs=pl.BlockSpec((1, Bp, lay["OUT_COLS"]), lambda t: (t, 0, 0)),
                scratch_shapes=[pltpu.VMEM((Bp, lay["STATE_COLS"]), f32)],
            ),
            compiler_params=pltpu.CompilerParams(dimension_semantics=("arbitrary",)),
        )(xs, init, slab)

        u_seq = out[:, :B, lay["O_U"]:lay["O_U"] + m]
        xi_seq = out[:, :B, lay["O_XI"]:lay["O_XI"] + n_xi]
        d_seq = out[:, :B, lay["O_D"]:lay["O_D"] + 1]
        return u_seq, xi_seq, d_seq

    def rollout(self, x_seq, xi0, omega0):
        x_old0, u_old0 = omega0
        return self._rollout_jit(jnp.asarray(x_seq, jnp.float32),
                                 jnp.asarray(xi0, jnp.float32),
                                 jnp.asarray(x_old0, jnp.float32),
                                 jnp.asarray(u_old0, jnp.float32),
                                 self.slab)

    def __call__(self, t, x_, xi, omega, gamma_bar):
        del t, gamma_bar   # bias=False => decay_rate**t * bias == 0; gamma_bar unused.
        x_old, u_old = omega
        x_ = jnp.asarray(x_, jnp.float32).reshape(-1, self.n)
        u_seq, xi_seq, d_seq = self._rollout_jit(
            x_[None],
            jnp.asarray(xi, jnp.float32).reshape(-1, self.n_xi),
            jnp.asarray(x_old, jnp.float32).reshape(-1, self.n),
            jnp.asarray(u_old, jnp.float32).reshape(-1, self.m),
            self.slab)
        u_, xi_new, delta = u_seq[0], xi_seq[0], d_seq[0]
        omega_ = (x_, u_)
        return u_, xi_new, omega_, delta


if __name__ == "__main__":
    n, m, n_xi, l = 4, 2, 8, 8   # plant state dim, control dim, REN state dim, REN nonlinearity dim
    hidden = 64

    ctrl = ControllerPallas(n, m, n_xi, l, hidden=hidden, seed=0)

    key = jax.random.PRNGKey(0)
    k1, k2, k3, k4, k5 = jax.random.split(key, 5)

    # ---- single-step forward (original Controller.forward API), B = 1 ----
    x_ = jax.random.normal(k1, (1, n), jnp.float32)
    xi = jax.random.normal(k2, (1, n_xi), jnp.float32)
    x_old = jax.random.normal(k3, (1, n), jnp.float32)
    u_old = jax.random.normal(k4, (1, m), jnp.float32)

    u_, xi_new, omega_, delta = ctrl(3, x_, xi, (x_old, u_old), 1.0)
    jax.block_until_ready((u_, xi_new, delta))
    assert u_.shape == (1, m) and xi_new.shape == (1, n_xi) and delta.shape == (1, 1)
    assert bool(jnp.all(jnp.isfinite(u_))) and bool(jnp.all(jnp.isfinite(xi_new)))
    assert bool(jnp.all(jnp.isfinite(delta)))

    u_ref, xi_ref, d_ref = reference_step(ctrl.params, x_, xi, x_old, u_old)
    assert bool(jnp.allclose(u_, u_ref, rtol=2e-3, atol=2e-3)), (u_, u_ref)
    assert bool(jnp.allclose(xi_new, xi_ref, rtol=2e-3, atol=2e-3)), (xi_new, xi_ref)
    assert bool(jnp.allclose(delta, d_ref, rtol=2e-3, atol=2e-3)), (delta, d_ref)

    # ---- multi-step closed-loop rollout in ONE pallas_call, batch B = 2 ----
    T, B = 6, 2
    x_seq = jax.random.normal(k5, (T, B, n), jnp.float32)
    xi0 = jnp.tile(xi, (B, 1))
    x_old0 = jnp.tile(x_old, (B, 1))
    u_old0 = jnp.tile(u_old, (B, 1))

    u_seq, xi_seq, d_seq = ctrl.rollout(x_seq, xi0, (x_old0, u_old0))
    jax.block_until_ready((u_seq, xi_seq, d_seq))
    assert u_seq.shape == (T, B, m) and xi_seq.shape == (T, B, n_xi) and d_seq.shape == (T, B, 1)

    # step-by-step pure-JAX reference, threading (xi, omega) exactly like Controller.forward
    xi_r, xo, uo = xi0, x_old0, u_old0
    ru, rx, rd = [], [], []
    for tt in range(T):
        u_r, xi_r, d_r = reference_step(ctrl.params, x_seq[tt], xi_r, xo, uo)
        ru.append(u_r)
        rx.append(xi_r)
        rd.append(d_r)
        xo, uo = x_seq[tt], u_r
    ru, rx, rd = jnp.stack(ru), jnp.stack(rx), jnp.stack(rd)

    assert bool(jnp.allclose(u_seq, ru, rtol=2e-3, atol=2e-3))
    assert bool(jnp.allclose(xi_seq, rx, rtol=2e-3, atol=2e-3))
    assert bool(jnp.allclose(d_seq, rd, rtol=2e-3, atol=2e-3))

    print("KERNEL_OK")
</pallas_src>

<mosaic_0001>
module attributes {stable_mosaic.version = 11 : i64} {
  func.func @controller_kernel(%arg0: i32, %arg1: memref<1x8x128xf32, #tpu.memory_space<vmem>>, %arg2: memref<8x128xf32, #tpu.memory_space<vmem>>, %arg3: memref<208x128xf32, #tpu.memory_space<vmem>>, %arg4: memref<1x8x128xf32, #tpu.memory_space<vmem>>, %arg5: memref<8x128xf32, #tpu.memory_space<vmem>>) attributes {dimension_semantics = [#tpu.dimension_semantics<arbitrary>], iteration_bounds = array<i64: 1>, scalar_prefetch = 0 : i64, scratch_operands = 1 : i64, tpu.core_type = #tpu.core_type<tc>, window_params = [{transform_indices = @transform_0, window_bounds = array<i64: 1, 8, 128>}, {pipeline_mode = #tpu.pipeline_mode<synchronous>, transform_indices = @transform_1, window_bounds = array<i64: 8, 128>}, {pipeline_mode = #tpu.pipeline_mode<synchronous>, transform_indices = @transform_2, window_bounds = array<i64: 208, 128>}, {transform_indices = @transform_3, window_bounds = array<i64: 1, 8, 128>}]} {
    %c0_i32 = arith.constant 0 : i32
    %0 = arith.cmpi eq, %arg0, %c0_i32 : i32
    %1 = arith.extui %0 : i1 to i32
    %c0_i32_0 = arith.constant 0 : i32
    %2 = arith.cmpi ne, %1, %c0_i32_0 : i32
    scf.if %2 {
      %c0_25 = arith.constant 0 : index
      %c0_26 = arith.constant 0 : index
      %100 = vector.load %arg2[%c0_25, %c0_26] : memref<8x128xf32, #tpu.memory_space<vmem>>, vector<8x128xf32>
      %c0_27 = arith.constant 0 : index
      %c0_28 = arith.constant 0 : index
      %101 = vector.load %arg5[%c0_27, %c0_28] : memref<8x128xf32, #tpu.memory_space<vmem>>, vector<8x128xf32>
      tpu.vector_store %arg5[%c0_27, %c0_28], %100 {strides = array<i32>} : memref<8x128xf32, #tpu.memory_space<vmem>>, vector<8x128xf32>,
    } else {
    }
    %c0 = arith.constant 0 : index
    %c0_1 = arith.constant 0 : index
    %c0_2 = arith.constant 0 : index
    %3 = vector.load %arg1[%c0, %c0_1, %c0_2] : memref<1x8x128xf32, #tpu.memory_space<vmem>>, vector<1x8x128xf32>
    %4 = vector.shape_cast %3 : vector<1x8x128xf32> to vector<8x128xf32>
    %5 = vector.extract_strided_slice %4 {offsets = [0, 0], sizes = [8, 4], strides = [1, 1]} : vector<8x128xf32> to vector<8x4xf32>
    %c0_3 = arith.constant 0 : index
    %c0_4 = arith.constant 0 : index
    %6 = vector.load %arg5[%c0_3, %c0_4] : memref<8x128xf32, #tpu.memory_space<vmem>>, vector<8x4xf32>
    tpu.vector_store %arg5[%c0_3, %c0_4], %5 {strides = array<i32>} : memref<8x128xf32, #tpu.memory_space<vmem>>, vector<8x4xf32>,
    %c0_5 = arith.constant 0 : index
    %c0_6 = arith.constant 0 : index
    %7 = vector.load %arg5[%c0_5, %c0_6] : memref<8x128xf32, #tpu.memory_space<vmem>>, vector<8x128xf32>
    %c0_7 = arith.constant 0 : index
    %c0_8 = arith.constant 0 : index
    %8 = vector.load %arg3[%c0_7, %c0_8] : memref<208x128xf32, #tpu.memory_space<vmem>>, vector<128x128xf32>
    %cst = arith.constant dense<0.000000e+00> : vector<8x128xf32>
    %9 = tpu.matmul %7, %8, %cst {dimension_numbers = #tpu.dot_dimension_numbers<[1], [0], [0], [1], [0, 0, 1, 1], [], []>, precision = #tpu.contract_precision<fp32>} : vector<8x128xf32>, vector<128x128xf32>, vector<8x128xf32> -> vector<8x128xf32>
    %c128 = arith.constant 128 : index
    %c0_9 = arith.constant 0 : index
    %10 = vector.load %arg3[%c128, %c0_9] : memref<208x128xf32, #tpu.memory_space<vmem>>, vector<8x128xf32>
    %11 = vector.extract_strided_slice %9 {offsets = [0, 0], sizes = [8, 1], strides = [1, 1]} : vector<8x128xf32> to vector<8x1xf32>
    %12 = math.tanh %11 : vector<8x1xf32>
    %13 = vector.extract_strided_slice %10 {offsets = [0, 0], sizes = [1, 128], strides = [1, 1]} : vector<8x128xf32> to vector<1x128xf32>
    %14 = vector.broadcast %12 : vector<8x1xf32> to vector<8x128xf32>
    %15 = vector.broadcast %13 : vector<1x128xf32> to vector<8x128xf32>
    %16 = arith.mulf %14, %15 : vector<8x128xf32>
    %17 = arith.addf %9, %16 : vector<8x128xf32>
    %18 = vector.extract_strided_slice %17 {offsets = [0, 1], sizes = [8, 1], strides = [1, 1]} : vector<8x128xf32> to vector<8x1xf32>
    %19 = math.tanh %18 : vector<8x1xf32>
    %20 = vector.extract_strided_slice %10 {offsets = [1, 0], sizes = [1, 128], strides = [1, 1]} : vector<8x128xf32> to vector<1x128xf32>
    %21 = vector.broadcast %19 : vector<8x1xf32> to vector<8x128xf32>
    %22 = vector.broadcast %20 : vector<1x128xf32> to vector<8x128xf32>
    %23 = arith.mulf %21, %22 : vector<8x128xf32>
    %24 = arith.addf %17, %23 : vector<8x128xf32>
    %25 = vector.extract_strided_slice %24 {offsets = [0, 2], sizes = [8, 1], strides = [1, 1]} : vector<8x128xf32> to vector<8x1xf32>
    %26 = math.tanh %25 : vector<8x1xf32>
    %27 = vector.extract_strided_slice %10 {offsets = [2, 0], sizes = [1, 128], strides = [1, 1]} : vector<8x128xf32> to vector<1x128xf32>
    %28 = vector.broadcast %26 : vector<8x1xf32> to vector<8x128xf32>
    %29 = vector.broadcast %27 : vector<1x128xf32> to vector<8x128xf32>
    %30 = arith.mulf %28, %29 : vector<8x128xf32>
    %31 = arith.addf %24, %30 : vector<8x128xf32>
    %32 = vector.extract_strided_slice %31 {offsets = [0, 3], sizes = [8, 1], strides = [1, 1]} : vector<8x128xf32> to vector<8x1xf32>
    %33 = math.tanh %32 : vector<8x1xf32>
    %34 = vector.extract_strided_slice %10 {offsets = [3, 0], sizes = [1, 128], strides = [1, 1]} : vector<8x128xf32> to vector<1x128xf32>
    %35 = vector.broadcast %33 : vector<8x1xf32> to vector<8x128xf32>
    %36 = vector.broadcast %34 : vector<1x128xf32> to vector<8x128xf32>
    %37 = arith.mulf %35, %36 : vector<8x128xf32>
    %38 = arith.addf %31, %37 : vector<8x128xf32>
    %39 = vector.extract_strided_slice %38 {offsets = [0, 4], sizes = [8, 1], strides = [1, 1]} : vector<8x128xf32> to vector<8x1xf32>
    %40 = math.tanh %39 : vector<8x1xf32>
    %41 = vector.extract_strided_slice %10 {offsets = [4, 0], sizes = [1, 128], strides = [1, 1]} : vector<8x128xf32> to vector<1x128xf32>
    %42 = vector.broadcast %40 : vector<8x1xf32> to vector<8x128xf32>
    %43 = vector.broadcast %41 : vector<1x128xf32> to vector<8x128xf32>
    %44 = arith.mulf %42, %43 : vector<8x128xf32>
    %45 = arith.addf %38, %44 : vector<8x128xf32>
    %46 = vector.extract_strided_slice %45 {offsets = [0, 5], sizes = [8, 1], strides = [1, 1]} : vector<8x128xf32> to vector<8x1xf32>
    %47 = math.tanh %46 : vector<8x1xf32>
    %48 = vector.extract_strided_slice %10 {offsets = [5, 0], sizes = [1, 128], strides = [1, 1]} : vector<8x128xf32> to vector<1x128xf32>
    %49 = vector.broadcast %47 : vector<8x1xf32> to vector<8x128xf32>
    %50 = vector.broadcast %48 : vector<1x128xf32> to vector<8x128xf32>
    %51 = arith.mulf %49, %50 : vector<8x128xf32>
    %52 = arith.addf %45, %51 : vector<8x128xf32>
    %53 = vector.extract_strided_slice %52 {offsets = [0, 6], sizes = [8, 1], strides = [1, 1]} : vector<8x128xf32> to vector<8x1xf32>
    %54 = math.tanh %53 : vector<8x1xf32>
    %55 = vector.extract_strided_slice %10 {offsets = [6, 0], sizes = [1, 128], strides = [1, 1]} : vector<8x128xf32> to vector<1x128xf32>
    %56 = vector.broadcast %54 : vector<8x1xf32> to vector<8x128xf32>
    %57 = vector.broadcast %55 : vector<1x128xf32> to vector<8x128xf32>
    %58 = arith.mulf %56, %57 : vector<8x128xf32>
    %59 = arith.addf %52, %58 : vector<8x128xf32>
    %60 = vector.extract_strided_slice %59 {offsets = [0, 7], sizes = [8, 1], strides = [1, 1]} : vector<8x128xf32> to vector<8x1xf32>
    %61 = math.tanh %60 : vector<8x1xf32>
    %62 = vector.extract_strided_slice %10 {offsets = [7, 0], sizes = [1, 128], strides = [1, 1]} : vector<8x128xf32> to vector<1x128xf32>
    %63 = vector.broadcast %61 : vector<8x1xf32> to vector<8x128xf32>
    %64 = vector.broadcast %62 : vector<1x128xf32> to vector<8x128xf32>
    %65 = arith.mulf %63, %64 : vector<8x128xf32>
    %66 = arith.addf %59, %65 : vector<8x128xf32>
    %67 = vector.extract_strided_slice %66 {offsets = [0, 8], sizes = [8, 8], strides = [1, 1]} : vector<8x128xf32> to vector<8x8xf32>
    %68 = vector.extract_strided_slice %66 {offsets = [0, 16], sizes = [8, 2], strides = [1, 1]} : vector<8x128xf32> to vector<8x2xf32>
    %69 = arith.negf %68 : vector<8x2xf32>
    %70 = math.exp %69 : vector<8x2xf32>
    %cst_10 = arith.constant 1.000000e+00 : f32
    %71 = vector.broadcast %cst_10 : f32 to vector<8x2xf32>
    %72 = arith.addf %71, %70 : vector<8x2xf32>
    %73 = arith.divf %71, %72 : vector<8x2xf32>
    %cst_11 = arith.constant 4.800000e+00 : f32
    %74 = vector.broadcast %cst_11 : f32 to vector<8x2xf32>
    %75 = arith.mulf %74, %73 : vector<8x2xf32>
    %cst_12 = arith.constant 8.000000e+00 : f32
    %76 = vector.broadcast %cst_12 : f32 to vector<8x2xf32>
    %77 = arith.addf %76, %75 : vector<8x2xf32>
    %78 = vector.extract_strided_slice %66 {offsets = [0, 64], sizes = [8, 64], strides = [1, 1]} : vector<8x128xf32> to vector<8x64xf32>
    %cst_13 = arith.constant 0.000000e+00 : f32
    %79 = vector.broadcast %cst_13 : f32 to vector<8x64xf32>
    %80 = arith.maximumf %78, %79 : vector<8x64xf32>
    %c136 = arith.constant 136 : index
    %c0_14 = arith.constant 0 : index
    %81 = vector.load %arg3[%c136, %c0_14] : memref<208x128xf32, #tpu.memory_space<vmem>>, vector<64x128xf32>
    %cst_15 = arith.constant dense<0.000000e+00> : vector<8x128xf32>
    %82 = tpu.matmul %80, %81, %cst_15 {dimension_numbers = #tpu.dot_dimension_numbers<[1], [0], [0], [1], [0, 0, 1, 1], [], []>, precision = #tpu.contract_precision<fp32>} : vector<8x64xf32>, vector<64x128xf32>, vector<8x128xf32> -> vector<8x128xf32>
    %c200 = arith.constant 200 : index
    %c0_16 = arith.constant 0 : index
    %83 = vector.load %arg3[%c200, %c0_16] : memref<208x128xf32, #tpu.memory_space<vmem>>, vector<1x1xf32>
    %84 = vector.extract_strided_slice %82 {offsets = [0, 0], sizes = [8, 1], strides = [1, 1]} : vector<8x128xf32> to vector<8x1xf32>
    %85 = vector.broadcast %83 : vector<1x1xf32> to vector<8x1xf32>
    %86 = arith.addf %84, %85 : vector<8x1xf32>
    %87 = arith.negf %86 : vector<8x1xf32>
    %88 = math.exp %87 : vector<8x1xf32>
    %cst_17 = arith.constant 1.000000e+00 : f32
    %89 = vector.broadcast %cst_17 : f32 to vector<8x1xf32>
    %90 = arith.addf %89, %88 : vector<8x1xf32>
    %91 = arith.divf %89, %90 : vector<8x1xf32>
    %cst_18 = arith.constant 0.000000e+00 : f32
    %92 = vector.broadcast %cst_18 : f32 to vector<8x117xf32>
    %93 = tpu.concatenate %77, %67, %91, %92 in 1 : vector<8x2xf32>, vector<8x8xf32>, vector<8x1xf32>, vector<8x117xf32> -> vector<8x128xf32>
    %c0_19 = arith.constant 0 : index
    %c0_20 = arith.constant 0 : index
    %c0_21 = arith.constant 0 : index
    %94 = vector.load %arg4[%c0_19, %c0_20, %c0_21] : memref<1x8x128xf32, #tpu.memory_space<vmem>>, vector<1x8x128xf32>
    %95 = vector.shape_cast %94 : vector<1x8x128xf32> to vector<8x128xf32>
    %96 = vector.shape_cast %93 : vector<8x128xf32> to vector<1x8x128xf32>
    tpu.vector_store %arg4[%c0_19, %c0_20, %c0_21], %96 {strides = array<i32>} : memref<1x8x128xf32, #tpu.memory_space<vmem>>, vector<1x8x128xf32>,
    %c0_22 = arith.constant 0 : index
    %c4 = arith.constant 4 : index
    %97 = vector.load %arg5[%c0_22, %c4] : memref<8x128xf32, #tpu.memory_space<vmem>>, vector<8x8xf32>
    tpu.vector_store %arg5[%c0_22, %c4], %67 {strides = array<i32>} : memref<8x128xf32, #tpu.memory_space<vmem>>, vector<8x8xf32>,
    %c0_23 = arith.constant 0 : index
    %c12 = arith.constant 12 : index
    %98 = vector.load %arg5[%c0_23, %c12] : memref<8x128xf32, #tpu.memory_space<vmem>>, vector<8x4xf32>
    tpu.vector_store %arg5[%c0_23, %c12], %5 {strides = array<i32>} : memref<8x128xf32, #tpu.memory_space<vmem>>, vector<8x4xf32>,
    %c0_24 = arith.constant 0 : index
    %c16 = arith.constant 16 : index
    %99 = vector.load %arg5[%c0_24, %c16] : memref<8x128xf32, #tpu.memory_space<vmem>>, vector<8x2xf32>
    tpu.vector_store %arg5[%c0_24, %c16], %77 {strides = array<i32>} : memref<8x128xf32, #tpu.memory_space<vmem>>, vector<8x2xf32>,
    return
  }
  func.func @transform_0(%arg0: i32) -> (i32, i32, i32) {
    %c0_i32 = arith.constant 0 : i32
    %c0_i32_0 = arith.constant 0 : i32
    %c0_i32_1 = arith.constant 0 : i32
    return %arg0, %c0_i32, %c0_i32_0 : i32, i32, i32
  }
  func.func @transform_1(%arg0: i32) -> (i32, i32) {
    %c0_i32 = arith.constant 0 : i32
    %c0_i32_0 = arith.constant 0 : i32
    %c0_i32_1 = arith.constant 0 : i32
    return %c0_i32, %c0_i32_0 : i32, i32
  }
  func.func @transform_2(%arg0: i32) -> (i32, i32) {
    %c0_i32 = arith.constant 0 : i32
    %c0_i32_0 = arith.constant 0 : i32
    %c0_i32_1 = arith.constant 0 : i32
    return %c0_i32, %c0_i32_0 : i32, i32
  }
  func.func @transform_3(%arg0: i32) -> (i32, i32, i32) {
    %c0_i32 = arith.constant 0 : i32
    %c0_i32_0 = arith.constant 0 : i32
    %c0_i32_1 = arith.constant 0 : i32
    return %arg0, %c0_i32, %c0_i32_0 : i32, i32, i32
  }
}

</mosaic_0001>

<llo_original>
// kernel: _rollout_impl.1
$region0: #{_rollout_impl.1}
  #allocation0 [shape = 'u32[]', space=smem, size = 0x4, offset = 0x4, fixed_abs, tag = 'smem constant byte address 0x4 - core index']
  #allocation1 [shape = 'u32[144,128]{1,0:T(1,128)}', space=vmem, size = 0x12000, scoped, tag = 'internal scratch']
  #allocation2 [shape = 'f32[8,128]{1,0:T(8,128)}', space=vmem, size = 0x1000, scoped, tag = 'scratch operand']
  %s0 = inlined_call_operand.vmem [shape: f32[1,8,128], index: 0, kind: input, shape index: {}]
  %s1 = inlined_call_operand.vmem [shape: f32[8,128], index: 1, kind: input, shape index: {}]
  %s2 = inlined_call_operand.hbm [shape: f32[208,128], index: 2, kind: input, shape index: {}]
  %s3 = inlined_call_operand.vmem [shape: f32[1,8,128], index: 3, kind: output, shape index: {}]
  %s4 = sld [smem:[#allocation0]]
  $region30: #{_rollout_impl.1} parent=0
    _
  %s6 = ssub.s32 1, %s4
  %s7 = scalar_select 0, %s6, %s4
  $region1: #{_rollout_impl.1} parent=0
    #allocation3 [shape = 'u8[106496]{0}', space=vmem, size = 0x1a000, scoped, tag = 'input window, operand 2, single buffered']
    #allocation4 [shape = 's32[1]{0}', space=sflag, size = 0x4, scoped, tag = 'scoped memory for _rollout_impl.1']
    %8 = vsyncpa [#allocation4], 0
    // Predicated region
    $region2: #{_rollout_impl.1} parent=1 // pred_check
      _
    $region3: #{_rollout_impl.1} parent=1 // pred_check_branch
      %10 = sbr.rel (0) target = $region5
    $region4: #{_rollout_impl.1} parent=1 // pred_region
      _
    $region5: #{_rollout_impl.1} parent=1 // pred_fallthru
      _
    // Predicated region
    $region6: #{_rollout_impl.1} parent=1 // pred_check
      _
    $region7: #{_rollout_impl.1} parent=1 // pred_check_branch
      %12 = sbr.rel (0) target = $region9
    $region8: #{_rollout_impl.1} parent=1 // pred_region
      _
    $region9: #{_rollout_impl.1} parent=1 // pred_fallthru
      _
    // Predicated region
    $region10: #{_rollout_impl.1} parent=1 // pred_check
      _
    $region11: #{_rollout_impl.1} parent=1 // pred_check_branch
      %14 = sbr.rel (0) target = $region13
    $region12: #{_rollout_impl.1} parent=1 // pred_region
      %s16 = ssub.s32 3328, 3328
      %17 = vsyncadd [#allocation4], %s16
      %s18 = sshll.u32 [#allocation3], 4
      %s19 = int_to_ptr.vmem [resolvable:$true] %s18
      %24 = dma.hbm_to_vmem [thread:$0]  %s2, 3328, %s19, [#allocation4], 128, 128, 8
    $region13: #{_rollout_impl.1} parent=1 // pred_fallthru
      _
    // Predicated region
    $region14: #{_rollout_impl.1} parent=1 // pred_check
      _
    $region15: #{_rollout_impl.1} parent=1 // pred_check_branch
      %26 = sbr.rel (0) target = $region17
    $region16: #{_rollout_impl.1} parent=1 // pred_region
      %27 = dma.done [#allocation4], 3328
    $region17: #{_rollout_impl.1} parent=1 // pred_fallthru
      _
    %p28 = scmp.eq.s32.totalorder 0, 0
    // Predicated region
    $region18: #{_rollout_impl.1} parent=1 // pred_check
      %p29 = pneg %p28
    $region19: #{_rollout_impl.1} parent=1 // pred_check_branch
      %31 = sbr.rel (%p29) target = $region21
    $region20: #{_rollout_impl.1} parent=1 // pred_region
      %v32 = vld [vmem:[%s1] sm:$0xff]
      %33 = vst [vmem:[#allocation2] sm:$0xff] %v32
    $region21: #{_rollout_impl.1} parent=1 // pred_fallthru
      _
    %v34 = vld [vmem:[%s0] sm:$0xff]
    %vm35 = vcmask 31744
    %36 = vst.msk [vmem:[#allocation2] sm:$0xff] %vm35, %v34
    %v37 = vld [vmem:[#allocation2] sm:$0xff]
    %v38 = vld [vmem:[#allocation3] sm:$0xff]
    %v39 = vld [vmem:[#allocation3 + $0x8] sm:$0xff]
    %v40 = vld [vmem:[#allocation3 + $0x10] sm:$0xff]
    %v41 = vld [vmem:[#allocation3 + $0x18] sm:$0xff]
    %v42 = vld [vmem:[#allocation3 + $0x20] sm:$0xff]
    %v43 = vld [vmem:[#allocation3 + $0x28] sm:$0xff]
    %v44 = vld [vmem:[#allocation3 + $0x30] sm:$0xff]
    %v45 = vld [vmem:[#allocation3 + $0x38] sm:$0xff]
    %v46 = vld [vmem:[#allocation3 + $0x40] sm:$0xff]
    %v47 = vld [vmem:[#allocation3 + $0x48] sm:$0xff]
    %v48 = vld [vmem:[#allocation3 + $0x50] sm:$0xff]
    %v49 = vld [vmem:[#allocation3 + $0x58] sm:$0xff]
    %v50 = vld [vmem:[#allocation3 + $0x60] sm:$0xff]
    %v51 = vld [vmem:[#allocation3 + $0x68] sm:$0xff]
    %v52 = vld [vmem:[#allocation3 + $0x70] sm:$0xff]
    %v53 = vld [vmem:[#allocation3 + $0x78] sm:$0xff]
    %54 = vmatprep.subr.mxu0 0.0
    %v55 = vand.u32 %v38, 4294901760
    %56 = vmatpush1.msra.mxu0 %v55
    %57 = vmatprep.subr.mxu0 0.0
    %v58 = vand.u32 %v39, 4294901760
    %59 = vmatpush1.msra.mxu0 %v58
    %60 = vmatprep.subr.mxu0 0.0
    %v61 = vand.u32 %v40, 4294901760
    %62 = vmatpush1.msra.mxu0 %v61
    %63 = vmatprep.subr.mxu0 0.0
    %v64 = vand.u32 %v41, 4294901760
    %65 = vmatpush1.msra.mxu0 %v64
    %66 = vmatprep.subr.mxu0 0.0
    %v67 = vand.u32 %v42, 4294901760
    %68 = vmatpush1.msra.mxu0 %v67
    %69 = vmatprep.subr.mxu0 0.0
    %v70 = vand.u32 %v43, 4294901760
    %71 = vmatpush1.msra.mxu0 %v70
    %72 = vmatprep.subr.mxu0 0.0
    %v73 = vand.u32 %v44, 4294901760
    %74 = vmatpush1.msra.mxu0 %v73
    %75 = vmatprep.subr.mxu0 0.0
    %v76 = vand.u32 %v45, 4294901760
    %77 = vmatpush1.msra.mxu0 %v76
    %78 = vmatprep.subr.mxu0 0.0
    %v79 = vand.u32 %v46, 4294901760
    %80 = vmatpush1.msra.mxu0 %v79
    %81 = vmatprep.subr.mxu0 0.0
    %v82 = vand.u32 %v47, 4294901760
    %83 = vmatpush1.msra.mxu0 %v82
    %84 = vmatprep.subr.mxu0 0.0
    %v85 = vand.u32 %v48, 4294901760
    %86 = vmatpush1.msra.mxu0 %v85
    %87 = vmatprep.subr.mxu0 0.0
    %v88 = vand.u32 %v49, 4294901760
    %89 = vmatpush1.msra.mxu0 %v88
    %90 = vmatprep.subr.mxu0 0.0
    %v91 = vand.u32 %v50, 4294901760
    %92 = vmatpush1.msra.mxu0 %v91
    %93 = vmatprep.subr.mxu0 0.0
    %v94 = vand.u32 %v51, 4294901760
    %95 = vmatpush1.msra.mxu0 %v94
    %96 = vmatprep.subr.mxu0 0.0
    %v97 = vand.u32 %v52, 4294901760
    %98 = vmatpush1.msra.mxu0 %v97
    %99 = vmatprep.subr.mxu0 0.0
    %v100 = vand.u32 %v53, 4294901760
    %101 = vmatpush1.msra.mxu0 %v100
    %102 = vmatprep.subr.mxu0 0.0
    %103 = vmatpush1.msra.mxu0 0.0
    %104 = vmatprep.subr.mxu0 0.0
    %105 = vmatpush1.msra.mxu0 0.0
    %106 = vmatprep.subr.mxu0 0.0
    %107 = vmatpush1.msra.mxu0 0.0
    %108 = vmatprep.subr.mxu0 0.0
    %109 = vmatpush1.msra.mxu0 0.0
    %110 = vmatprep.subr.mxu0 0.0
    %111 = vmatpush1.msra.mxu0 0.0
    %112 = vmatprep.subr.mxu0 0.0
    %113 = vmatpush1.msra.mxu0 0.0
    %114 = vmatprep.subr.mxu0 0.0
    %115 = vmatpush1.msra.mxu0 0.0
    %116 = vmatprep.subr.mxu0 0.0
    %117 = vmatpush1.msra.mxu0 0.0
    %118 = vmatprep.subr.mxu0 0.0
    %119 = vmatpush1.msra.mxu0 0.0
    %120 = vmatprep.subr.mxu0 0.0
    %121 = vmatpush1.msra.mxu0 0.0
    %122 = vmatprep.subr.mxu0 0.0
    %123 = vmatpush1.msra.mxu0 0.0
    %124 = vmatprep.subr.mxu0 0.0
    %125 = vmatpush1.msra.mxu0 0.0
    %126 = vmatprep.subr.mxu0 0.0
    %127 = vmatpush1.msra.mxu0 0.0
    %128 = vmatprep.subr.mxu0 0.0
    %129 = vmatpush1.msra.mxu0 0.0
    %130 = vmatprep.subr.mxu0 0.0
    %131 = vmatpush1.msra.mxu0 0.0
    %132 = vmatprep.subr.mxu0 0.0
    %133 = vmatpush1.msra.mxu0 0.0
    %134 = vmatprep.mubr.f32.mxu0 0.0
    %v135 = vand.u32 %v37, 4294901760
    %v136 = vsub.f32 %v37, %v135
    %v137 = vand.u32 %v136, 4294901760
    %v138 = vsub.f32 %v136, %v137
    %v139 = vand.u32 %v138, 4294901760
    %140 = vmatmul.mubr.f32.gmra.mrb[0].mxu0 %v139
    %v141 = vpop.f32.mrb[0].mxu0
    %v142 = vadd.f32 0.0, %v141
    %v143 = vpop.f32.mrb[0].mxu0
    %144 = vdwg.mxu0
    %145 = vmatprep.subr.mxu0 0.0
    %v146 = vand.u32 %v38, 4294901760
    %v147 = vsub.f32 %v38, %v146
    %v148 = vand.u32 %v147, 4294901760
    %v149 = vsub.f32 %v147, %v148
    %v150 = vand.u32 %v149, 4294901760
    %151 = vmatpush1.msra.mxu0 %v150
    %152 = vmatprep.subr.mxu0 0.0
    %v153 = vand.u32 %v39, 4294901760
    %v154 = vsub.f32 %v39, %v153
    %v155 = vand.u32 %v154, 4294901760
    %v156 = vsub.f32 %v154, %v155
    %v157 = vand.u32 %v156, 4294901760
    %158 = vmatpush1.msra.mxu0 %v157
    %159 = vmatprep.subr.mxu0 0.0
    %v160 = vand.u32 %v40, 4294901760
    %v161 = vsub.f32 %v40, %v160
    %v162 = vand.u32 %v161, 4294901760
    %v163 = vsub.f32 %v161, %v162
    %v164 = vand.u32 %v163, 4294901760
    %165 = vmatpush1.msra.mxu0 %v164
    %166 = vmatprep.subr.mxu0 0.0
    %v167 = vand.u32 %v41, 4294901760
    %v168 = vsub.f32 %v41, %v167
    %v169 = vand.u32 %v168, 4294901760
    %v170 = vsub.f32 %v168, %v169
    %v171 = vand.u32 %v170, 4294901760
    %172 = vmatpush1.msra.mxu0 %v171
    %173 = vmatprep.subr.mxu0 0.0
    %v174 = vand.u32 %v42, 4294901760
    %v175 = vsub.f32 %v42, %v174
    %v176 = vand.u32 %v175, 4294901760
    %v177 = vsub.f32 %v175, %v176
    %v178 = vand.u32 %v177, 4294901760
    %179 = vmatpush1.msra.mxu0 %v178
    %180 = vmatprep.subr.mxu0 0.0
    %v181 = vand.u32 %v43, 4294901760
    %v182 = vsub.f32 %v43, %v181
    %v183 = vand.u32 %v182, 4294901760
    %v184 = vsub.f32 %v182, %v183
    %v185 = vand.u32 %v184, 4294901760
    %186 = vmatpush1.msra.mxu0 %v185
    %187 = vmatprep.subr.mxu0 0.0
    %v188 = vand.u32 %v44, 4294901760
    %v189 = vsub.f32 %v44, %v188
    %v190 = vand.u32 %v189, 4294901760
    %v191 = vsub.f32 %v189, %v190
    %v192 = vand.u32 %v191, 4294901760
    %193 = vmatpush1.msra.mxu0 %v192
    %194 = vmatprep.subr.mxu0 0.0
    %v195 = vand.u32 %v45, 4294901760
    %v196 = vsub.f32 %v45, %v195
    %v197 = vand.u32 %v196, 4294901760
    %v198 = vsub.f32 %v196, %v197
    %v199 = vand.u32 %v198, 4294901760
    %200 = vmatpush1.msra.mxu0 %v199
    %201 = vmatprep.subr.mxu0 0.0
    %v202 = vand.u32 %v46, 4294901760
    %v203 = vsub.f32 %v46, %v202
    %v204 = vand.u32 %v203, 4294901760
    %v205 = vsub.f32 %v203, %v204
    %v206 = vand.u32 %v205, 4294901760
    %207 = vmatpush1.msra.mxu0 %v206
    %208 = vmatprep.subr.mxu0 0.0
    %v209 = vand.u32 %v47, 4294901760
    %v210 = vsub.f32 %v47, %v209
    %v211 = vand.u32 %v210, 4294901760
    %v212 = vsub.f32 %v210, %v211
    %v213 = vand.u32 %v212, 4294901760
    %214 = vmatpush1.msra.mxu0 %v213
    %215 = vmatprep.subr.mxu0 0.0
    %v216 = vand.u32 %v48, 4294901760
    %v217 = vsub.f32 %v48, %v216
    %v218 = vand.u32 %v217, 4294901760
    %v219 = vsub.f32 %v217, %v218
    %v220 = vand.u32 %v219, 4294901760
    %221 = vmatpush1.msra.mxu0 %v220
    %222 = vmatprep.subr.mxu0 0.0
    %v223 = vand.u32 %v49, 4294901760
    %v224 = vsub.f32 %v49, %v223
    %v225 = vand.u32 %v224, 4294901760
    %v226 = vsub.f32 %v224, %v225
    %v227 = vand.u32 %v226, 4294901760
    %228 = vmatpush1.msra.mxu0 %v227
    %229 = vmatprep.subr.mxu0 0.0
    %v230 = vand.u32 %v50, 4294901760
    %v231 = vsub.f32 %v50, %v230
    %v232 = vand.u32 %v231, 4294901760
    %v233 = vsub.f32 %v231, %v232
    %v234 = vand.u32 %v233, 4294901760
    %235 = vmatpush1.msra.mxu0 %v234
    %236 = vmatprep.subr.mxu0 0.0
    %v237 = vand.u32 %v51, 4294901760
    %v238 = vsub.f32 %v51, %v237
    %v239 = vand.u32 %v238, 4294901760
    %v240 = vsub.f32 %v238, %v239
    %v241 = vand.u32 %v240, 4294901760
    %242 = vmatpush1.msra.mxu0 %v241
    %243 = vmatprep.subr.mxu0 0.0
    %v244 = vand.u32 %v52, 4294901760
    %v245 = vsub.f32 %v52, %v244
    %v246 = vand.u32 %v245, 4294901760
    %v247 = vsub.f32 %v245, %v246
    %v248 = vand.u32 %v247, 4294901760
    %249 = vmatpush1.msra.mxu0 %v248
    %250 = vmatprep.subr.mxu0 0.0
    %v251 = vand.u32 %v53, 4294901760
    %v252 = vsub.f32 %v53, %v251
    %v253 = vand.u32 %v252, 4294901760
    %v254 = vsub.f32 %v252, %v253
    %v255 = vand.u32 %v254, 4294901760
    %256 = vmatpush1.msra.mxu0 %v255
    %257 = vmatprep.subr.mxu0 0.0
    %258 = vmatpush1.msra.mxu0 0.0
    %259 = vmatprep.subr.mxu0 0.0
    %260 = vmatpush1.msra.mxu0 0.0
    %261 = vmatprep.subr.mxu0 0.0
    %262 = vmatpush1.msra.mxu0 0.0
    %263 = vmatprep.subr.mxu0 0.0
    %264 = vmatpush1.msra.mxu0 0.0
    %265 = vmatprep.subr.mxu0 0.0
    %266 = vmatpush1.msra.mxu0 0.0
    %267 = vmatprep.subr.mxu0 0.0
    %268 = vmatpush1.msra.mxu0 0.0
    %269 = vmatprep.subr.mxu0 0.0
    %270 = vmatpush1.msra.mxu0 0.0
    %271 = vmatprep.subr.mxu0 0.0
    %272 = vmatpush1.msra.mxu0 0.0
    %273 = vmatprep.subr.mxu0 0.0
    %274 = vmatpush1.msra.mxu0 0.0
    %275 = vmatprep.subr.mxu0 0.0
    %276 = vmatpush1.msra.mxu0 0.0
    %277 = vmatprep.subr.mxu0 0.0
    %278 = vmatpush1.msra.mxu0 0.0
    %279 = vmatprep.subr.mxu0 0.0
    %280 = vmatpush1.msra.mxu0 0.0
    %281 = vmatprep.subr.mxu0 0.0
    %282 = vmatpush1.msra.mxu0 0.0
    %283 = vmatprep.subr.mxu0 0.0
    %284 = vmatpush1.msra.mxu0 0.0
    %285 = vmatprep.subr.mxu0 0.0
    %286 = vmatpush1.msra.mxu0 0.0
    %287 = vmatprep.subr.mxu0 0.0
    %288 = vmatpush1.msra.mxu0 0.0
    %289 = vmatprep.mubr.f32.mxu0 0.0
    %v290 = vand.u32 %v37, 4294901760
    %291 = vmatmul.mubr.f32.gmra.mrb[0].mxu0 %v290
    %v292 = vpop.f32.mrb[0].mxu0
    %v293 = vadd.f32 %v142, %v292
    %v294 = vpop.f32.mrb[0].mxu0
    %295 = vdwg.mxu0
    %296 = vmatprep.subr.mxu0 0.0
    %v297 = vand.u32 %v38, 4294901760
    %v298 = vsub.f32 %v38, %v297
    %299 = vmatpush1.msra.mxu0 %v298
    %300 = vmatprep.subr.mxu0 0.0
    %v301 = vand.u32 %v39, 4294901760
    %v302 = vsub.f32 %v39, %v301
    %303 = vmatpush1.msra.mxu0 %v302
    %304 = vmatprep.subr.mxu0 0.0
    %v305 = vand.u32 %v40, 4294901760
    %v306 = vsub.f32 %v40, %v305
    %307 = vmatpush1.msra.mxu0 %v306
    %308 = vmatprep.subr.mxu0 0.0
    %v309 = vand.u32 %v41, 4294901760
    %v310 = vsub.f32 %v41, %v309
    %311 = vmatpush1.msra.mxu0 %v310
    %312 = vmatprep.subr.mxu0 0.0
    %v313 = vand.u32 %v42, 4294901760
    %v314 = vsub.f32 %v42, %v313
    %315 = vmatpush1.msra.mxu0 %v314
    %316 = vmatprep.subr.mxu0 0.0
    %v317 = vand.u32 %v43, 4294901760
    %v318 = vsub.f32 %v43, %v317
    %319 = vmatpush1.msra.mxu0 %v318
    %320 = vmatprep.subr.mxu0 0.0
    %v321 = vand.u32 %v44, 4294901760
    %v322 = vsub.f32 %v44, %v321
    %323 = vmatpush1.msra.mxu0 %v322
    %324 = vmatprep.subr.mxu0 0.0
    %v325 = vand.u32 %v45, 4294901760
    %v326 = vsub.f32 %v45, %v325
    %327 = vmatpush1.msra.mxu0 %v326
    %328 = vmatprep.subr.mxu0 0.0
    %v329 = vand.u32 %v46, 4294901760
    %v330 = vsub.f32 %v46, %v329
    %331 = vmatpush1.msra.mxu0 %v330
    %332 = vmatprep.subr.mxu0 0.0
    %v333 = vand.u32 %v47, 4294901760
    %v334 = vsub.f32 %v47, %v333
    %335 = vmatpush1.msra.mxu0 %v334
    %336 = vmatprep.subr.mxu0 0.0
    %v337 = vand.u32 %v48, 4294901760
    %v338 = vsub.f32 %v48, %v337
    %339 = vmatpush1.msra.mxu0 %v338
    %340 = vmatprep.subr.mxu0 0.0
    %v341 = vand.u32 %v49, 4294901760
    %v342 = vsub.f32 %v49, %v341
    %343 = vmatpush1.msra.mxu0 %v342
    %344 = vmatprep.subr.mxu0 0.0
    %v345 = vand.u32 %v50, 4294901760
    %v346 = vsub.f32 %v50, %v345
    %347 = vmatpush1.msra.mxu0 %v346
    %348 = vmatprep.subr.mxu0 0.0
    %v349 = vand.u32 %v51, 4294901760
    %v350 = vsub.f32 %v51, %v349
    %351 = vmatpush1.msra.mxu0 %v350
    %352 = vmatprep.subr.mxu0 0.0
    %v353 = vand.u32 %v52, 4294901760
    %v354 = vsub.f32 %v52, %v353
    %355 = vmatpush1.msra.mxu0 %v354
    %356 = vmatprep.subr.mxu0 0.0
    %v357 = vand.u32 %v53, 4294901760
    %v358 = vsub.f32 %v53, %v357
    %359 = vmatpush1.msra.mxu0 %v358
    %360 = vmatprep.subr.mxu0 0.0
    %361 = vmatpush1.msra.mxu0 0.0
    %362 = vmatprep.subr.mxu0 0.0
    %363 = vmatpush1.msra.mxu0 0.0
    %364 = vmatprep.subr.mxu0 0.0
    %365 = vmatpush1.msra.mxu0 0.0
    %366 = vmatprep.subr.mxu0 0.0
    %367 = vmatpush1.msra.mxu0 0.0
    %368 = vmatprep.subr.mxu0 0.0
    %369 = vmatpush1.msra.mxu0 0.0
    %370 = vmatprep.subr.mxu0 0.0
    %371 = vmatpush1.msra.mxu0 0.0
    %372 = vmatprep.subr.mxu0 0.0
    %373 = vmatpush1.msra.mxu0 0.0
    %374 = vmatprep.subr.mxu0 0.0
    %375 = vmatpush1.msra.mxu0 0.0
    %376 = vmatprep.subr.mxu0 0.0
    %377 = vmatpush1.msra.mxu0 0.0
    %378 = vmatprep.subr.mxu0 0.0
    %379 = vmatpush1.msra.mxu0 0.0
    %380 = vmatprep.subr.mxu0 0.0
    %381 = vmatpush1.msra.mxu0 0.0
    %382 = vmatprep.subr.mxu0 0.0
    %383 = vmatpush1.msra.mxu0 0.0
    %384 = vmatprep.subr.mxu0 0.0
    %385 = vmatpush1.msra.mxu0 0.0
    %386 = vmatprep.subr.mxu0 0.0
    %387 = vmatpush1.msra.mxu0 0.0
    %388 = vmatprep.subr.mxu0 0.0
    %389 = vmatpush1.msra.mxu0 0.0
    %390 = vmatprep.subr.mxu0 0.0
    %391 = vmatpush1.msra.mxu0 0.0
    %392 = vmatprep.mubr.f32.mxu0 0.0
    %v393 = vand.u32 %v37, 4294901760
    %v394 = vsub.f32 %v37, %v393
    %395 = vmatmul.mubr.f32.gmra.mrb[0].mxu0 %v394
    %v396 = vpop.f32.mrb[0].mxu0
    %v397 = vadd.f32 %v293, %v396
    %v398 = vpop.f32.mrb[0].mxu0
    %399 = vdwg.mxu0
    %400 = vmatprep.subr.mxu0 0.0
    %v401 = vand.u32 %v38, 4294901760
    %402 = vmatpush1.msra.mxu0 %v401
    %403 = vmatprep.subr.mxu0 0.0
    %v404 = vand.u32 %v39, 4294901760
    %405 = vmatpush1.msra.mxu0 %v404
    %406 = vmatprep.subr.mxu0 0.0
    %v407 = vand.u32 %v40, 4294901760
    %408 = vmatpush1.msra.mxu0 %v407
    %409 = vmatprep.subr.mxu0 0.0
    %v410 = vand.u32 %v41, 4294901760
    %411 = vmatpush1.msra.mxu0 %v410
    %412 = vmatprep.subr.mxu0 0.0
    %v413 = vand.u32 %v42, 4294901760
    %414 = vmatpush1.msra.mxu0 %v413
    %415 = vmatprep.subr.mxu0 0.0
    %v416 = vand.u32 %v43, 4294901760
    %417 = vmatpush1.msra.mxu0 %v416
    %418 = vmatprep.subr.mxu0 0.0
    %v419 = vand.u32 %v44, 4294901760
    %420 = vmatpush1.msra.mxu0 %v419
    %421 = vmatprep.subr.mxu0 0.0
    %v422 = vand.u32 %v45, 4294901760
    %423 = vmatpush1.msra.mxu0 %v422
    %424 = vmatprep.subr.mxu0 0.0
    %v425 = vand.u32 %v46, 4294901760
    %426 = vmatpush1.msra.mxu0 %v425
    %427 = vmatprep.subr.mxu0 0.0
    %v428 = vand.u32 %v47, 4294901760
    %429 = vmatpush1.msra.mxu0 %v428
    %430 = vmatprep.subr.mxu0 0.0
    %v431 = vand.u32 %v48, 4294901760
    %432 = vmatpush1.msra.mxu0 %v431
    %433 = vmatprep.subr.mxu0 0.0
    %v434 = vand.u32 %v49, 4294901760
    %435 = vmatpush1.msra.mxu0 %v434
    %436 = vmatprep.subr.mxu0 0.0
    %v437 = vand.u32 %v50, 4294901760
    %438 = vmatpush1.msra.mxu0 %v437
    %439 = vmatprep.subr.mxu0 0.0
    %v440 = vand.u32 %v51, 4294901760
    %441 = vmatpush1.msra.mxu0 %v440
    %442 = vmatprep.subr.mxu0 0.0
    %v443 = vand.u32 %v52, 4294901760
    %444 = vmatpush1.msra.mxu0 %v443
    %445 = vmatprep.subr.mxu0 0.0
    %v446 = vand.u32 %v53, 4294901760
    %447 = vmatpush1.msra.mxu0 %v446
    %448 = vmatprep.subr.mxu0 0.0
    %449 = vmatpush1.msra.mxu0 0.0
    %450 = vmatprep.subr.mxu0 0.0
    %451 = vmatpush1.msra.mxu0 0.0
    %452 = vmatprep.subr.mxu0 0.0
    %453 = vmatpush1.msra.mxu0 0.0
    %454 = vmatprep.subr.mxu0 0.0
    %455 = vmatpush1.msra.mxu0 0.0
    %456 = vmatprep.subr.mxu0 0.0
    %457 = vmatpush1.msra.mxu0 0.0
    %458 = vmatprep.subr.mxu0 0.0
    %459 = vmatpush1.msra.mxu0 0.0
    %460 = vmatprep.subr.mxu0 0.0
    %461 = vmatpush1.msra.mxu0 0.0
    %462 = vmatprep.subr.mxu0 0.0
    %463 = vmatpush1.msra.mxu0 0.0
    %464 = vmatprep.subr.mxu0 0.0
    %465 = vmatpush1.msra.mxu0 0.0
    %466 = vmatprep.subr.mxu0 0.0
    %467 = vmatpush1.msra.mxu0 0.0
    %468 = vmatprep.subr.mxu0 0.0
    %469 = vmatpush1.msra.mxu0 0.0
    %470 = vmatprep.subr.mxu0 0.0
    %471 = vmatpush1.msra.mxu0 0.0
    %472 = vmatprep.subr.mxu0 0.0
    %473 = vmatpush1.msra.mxu0 0.0
    %474 = vmatprep.subr.mxu0 0.0
    %475 = vmatpush1.msra.mxu0 0.0
    %476 = vmatprep.subr.mxu0 0.0
    %477 = vmatpush1.msra.mxu0 0.0
    %478 = vmatprep.subr.mxu0 0.0
    %479 = vmatpush1.msra.mxu0 0.0
    %480 = vmatprep.mubr.f32.mxu0 0.0
    %v481 = vand.u32 %v37, 4294901760
    %v482 = vsub.f32 %v37, %v481
    %v483 = vand.u32 %v482, 4294901760
    %484 = vmatmul.mubr.f32.gmra.mrb[0].mxu0 %v483
    %v485 = vpop.f32.mrb[0].mxu0
    %v486 = vadd.f32 %v397, %v485
    %v487 = vpop.f32.mrb[0].mxu0
    %488 = vdwg.mxu0
    %489 = vmatprep.subr.mxu0 0.0
    %v490 = vand.u32 %v38, 4294901760
    %v491 = vsub.f32 %v38, %v490
    %v492 = vand.u32 %v491, 4294901760
    %493 = vmatpush1.msra.mxu0 %v492
    %494 = vmatprep.subr.mxu0 0.0
    %v495 = vand.u32 %v39, 4294901760
    %v496 = vsub.f32 %v39, %v495
    %v497 = vand.u32 %v496, 4294901760
    %498 = vmatpush1.msra.mxu0 %v497
    %499 = vmatprep.subr.mxu0 0.0
    %v500 = vand.u32 %v40, 4294901760
    %v501 = vsub.f32 %v40, %v500
    %v502 = vand.u32 %v501, 4294901760
    %503 = vmatpush1.msra.mxu0 %v502
    %504 = vmatprep.subr.mxu0 0.0
    %v505 = vand.u32 %v41, 4294901760
    %v506 = vsub.f32 %v41, %v505
    %v507 = vand.u32 %v506, 4294901760
    %508 = vmatpush1.msra.mxu0 %v507
    %509 = vmatprep.subr.mxu0 0.0
    %v510 = vand.u32 %v42, 4294901760
    %v511 = vsub.f32 %v42, %v510
    %v512 = vand.u32 %v511, 4294901760
    %513 = vmatpush1.msra.mxu0 %v512
    %514 = vmatprep.subr.mxu0 0.0
    %v515 = vand.u32 %v43, 4294901760
    %v516 = vsub.f32 %v43, %v515
    %v517 = vand.u32 %v516, 4294901760
    %518 = vmatpush1.msra.mxu0 %v517
    %519 = vmatprep.subr.mxu0 0.0
    %v520 = vand.u32 %v44, 4294901760
    %v521 = vsub.f32 %v44, %v520
    %v522 = vand.u32 %v521, 4294901760
    %523 = vmatpush1.msra.mxu0 %v522
    %524 = vmatprep.subr.mxu0 0.0
    %v525 = vand.u32 %v45, 4294901760
    %v526 = vsub.f32 %v45, %v525
    %v527 = vand.u32 %v526, 4294901760
    %528 = vmatpush1.msra.mxu0 %v527
    %529 = vmatprep.subr.mxu0 0.0
    %v530 = vand.u32 %v46, 4294901760
    %v531 = vsub.f32 %v46, %v530
    %v532 = vand.u32 %v531, 4294901760
    %533 = vmatpush1.msra.mxu0 %v532
    %534 = vmatprep.subr.mxu0 0.0
    %v535 = vand.u32 %v47, 4294901760
    %v536 = vsub.f32 %v47, %v535
    %v537 = vand.u32 %v536, 4294901760
    %538 = vmatpush1.msra.mxu0 %v537
    %539 = vmatprep.subr.mxu0 0.0
    %v540 = vand.u32 %v48, 4294901760
    %v541 = vsub.f32 %v48, %v540
    %v542 = vand.u32 %v541, 4294901760
    %543 = vmatpush1.msra.mxu0 %v542
    %544 = vmatprep.subr.mxu0 0.0
    %v545 = vand.u32 %v49, 4294901760
    %v546 = vsub.f32 %v49, %v545
    %v547 = vand.u32 %v546, 4294901760
    %548 = vmatpush1.msra.mxu0 %v547
    %549 = vmatprep.subr.mxu0 0.0
    %v550 = vand.u32 %v50, 4294901760
    %v551 = vsub.f32 %v50, %v550
    %v552 = vand.u32 %v551, 4294901760
    %553 = vmatpush1.msra.mxu0 %v552
    %554 = vmatprep.subr.mxu0 0.0
    %v555 = vand.u32 %v51, 4294901760
    %v556 = vsub.f32 %v51, %v555
    %v557 = vand.u32 %v556, 4294901760
    %558 = vmatpush1.msra.mxu0 %v557
    %559 = vmatprep.subr.mxu0 0.0
    %v560 = vand.u32 %v52, 4294901760
    %v561 = vsub.f32 %v52, %v560
    %v562 = vand.u32 %v561, 4294901760
    %563 = vmatpush1.msra.mxu0 %v562
    %564 = vmatprep.subr.mxu0 0.0
    %v565 = vand.u32 %v53, 4294901760
    %v566 = vsub.f32 %v53, %v565
    %v567 = vand.u32 %v566, 4294901760
    %568 = vmatpush1.msra.mxu0 %v567
    %569 = vmatprep.subr.mxu0 0.0
    %570 = vmatpush1.msra.mxu0 0.0
    %571 = vmatprep.subr.mxu0 0.0
    %572 = vmatpush1.msra.mxu0 0.0
    %573 = vmatprep.subr.mxu0 0.0
    %574 = vmatpush1.msra.mxu0 0.0
    %575 = vmatprep.subr.mxu0 0.0
    %576 = vmatpush1.msra.mxu0 0.0
    %577 = vmatprep.subr.mxu0 0.0
    %578 = vmatpush1.msra.mxu0 0.0
    %579 = vmatprep.subr.mxu0 0.0
    %580 = vmatpush1.msra.mxu0 0.0
    %581 = vmatprep.subr.mxu0 0.0
    %582 = vmatpush1.msra.mxu0 0.0
    %583 = vmatprep.subr.mxu0 0.0
    %584 = vmatpush1.msra.mxu0 0.0
    %585 = vmatprep.subr.mxu0 0.0
    %586 = vmatpush1.msra.mxu0 0.0
    %587 = vmatprep.subr.mxu0 0.0
    %588 = vmatpush1.msra.mxu0 0.0
    %589 = vmatprep.subr.mxu0 0.0
    %590 = vmatpush1.msra.mxu0 0.0
    %591 = vmatprep.subr.mxu0 0.0
    %592 = vmatpush1.msra.mxu0 0.0
    %593 = vmatprep.subr.mxu0 0.0
    %594 = vmatpush1.msra.mxu0 0.0
    %595 = vmatprep.subr.mxu0 0.0
    %596 = vmatpush1.msra.mxu0 0.0
    %597 = vmatprep.subr.mxu0 0.0
    %598 = vmatpush1.msra.mxu0 0.0
    %599 = vmatprep.subr.mxu0 0.0
    %600 = vmatpush1.msra.mxu0 0.0
    %601 = vmatprep.mubr.f32.mxu0 0.0
    %v602 = vand.u32 %v37, 4294901760
    %603 = vmatmul.mubr.f32.gmra.mrb[0].mxu0 %v602
    %v604 = vpop.f32.mrb[0].mxu0
    %v605 = vadd.f32 %v486, %v604
    %v606 = vpop.f32.mrb[0].mxu0
    %607 = vdwg.mxu0
    %608 = vmatprep.subr.mxu0 0.0
    %v609 = vand.u32 %v38, 4294901760
    %610 = vmatpush1.msra.mxu0 %v609
    %611 = vmatprep.subr.mxu0 0.0
    %v612 = vand.u32 %v39, 4294901760
    %613 = vmatpush1.msra.mxu0 %v612
    %614 = vmatprep.subr.mxu0 0.0
    %v615 = vand.u32 %v40, 4294901760
    %616 = vmatpush1.msra.mxu0 %v615
    %617 = vmatprep.subr.mxu0 0.0
    %v618 = vand.u32 %v41, 4294901760
    %619 = vmatpush1.msra.mxu0 %v618
    %620 = vmatprep.subr.mxu0 0.0
    %v621 = vand.u32 %v42, 4294901760
    %622 = vmatpush1.msra.mxu0 %v621
    %623 = vmatprep.subr.mxu0 0.0
    %v624 = vand.u32 %v43, 4294901760
    %625 = vmatpush1.msra.mxu0 %v624
    %626 = vmatprep.subr.mxu0 0.0
    %v627 = vand.u32 %v44, 4294901760
    %628 = vmatpush1.msra.mxu0 %v627
    %629 = vmatprep.subr.mxu0 0.0
    %v630 = vand.u32 %v45, 4294901760
    %631 = vmatpush1.msra.mxu0 %v630
    %632 = vmatprep.subr.mxu0 0.0
    %v633 = vand.u32 %v46, 4294901760
    %634 = vmatpush1.msra.mxu0 %v633
    %635 = vmatprep.subr.mxu0 0.0
    %v636 = vand.u32 %v47, 4294901760
    %637 = vmatpush1.msra.mxu0 %v636
    %638 = vmatprep.subr.mxu0 0.0
    %v639 = vand.u32 %v48, 4294901760
    %640 = vmatpush1.msra.mxu0 %v639
    %641 = vmatprep.subr.mxu0 0.0
    %v642 = vand.u32 %v49, 4294901760
    %643 = vmatpush1.msra.mxu0 %v642
    %644 = vmatprep.subr.mxu0 0.0
    %v645 = vand.u32 %v50, 4294901760
    %646 = vmatpush1.msra.mxu0 %v645
    %647 = vmatprep.subr.mxu0 0.0
    %v648 = vand.u32 %v51, 4294901760
    %649 = vmatpush1.msra.mxu0 %v648
    %650 = vmatprep.subr.mxu0 0.0
    %v651 = vand.u32 %v52, 4294901760
    %652 = vmatpush1.msra.mxu0 %v651
    %653 = vmatprep.subr.mxu0 0.0
    %v654 = vand.u32 %v53, 4294901760
    %655 = vmatpush1.msra.mxu0 %v654
    %656 = vmatprep.subr.mxu0 0.0
    %657 = vmatpush1.msra.mxu0 0.0
    %658 = vmatprep.subr.mxu0 0.0
    %659 = vmatpush1.msra.mxu0 0.0
    %660 = vmatprep.subr.mxu0 0.0
    %661 = vmatpush1.msra.mxu0 0.0
    %662 = vmatprep.subr.mxu0 0.0
    %663 = vmatpush1.msra.mxu0 0.0
    %664 = vmatprep.subr.mxu0 0.0
    %665 = vmatpush1.msra.mxu0 0.0
    %666 = vmatprep.subr.mxu0 0.0
    %667 = vmatpush1.msra.mxu0 0.0
    %668 = vmatprep.subr.mxu0 0.0
    %669 = vmatpush1.msra.mxu0 0.0
    %670 = vmatprep.subr.mxu0 0.0
    %671 = vmatpush1.msra.mxu0 0.0
    %672 = vmatprep.subr.mxu0 0.0
    %673 = vmatpush1.msra.mxu0 0.0
    %674 = vmatprep.subr.mxu0 0.0
    %675 = vmatpush1.msra.mxu0 0.0
    %676 = vmatprep.subr.mxu0 0.0
    %677 = vmatpush1.msra.mxu0 0.0
    %678 = vmatprep.subr.mxu0 0.0
    %679 = vmatpush1.msra.mxu0 0.0
    %680 = vmatprep.subr.mxu0 0.0
    %681 = vmatpush1.msra.mxu0 0.0
    %682 = vmatprep.subr.mxu0 0.0
    %683 = vmatpush1.msra.mxu0 0.0
    %684 = vmatprep.subr.mxu0 0.0
    %685 = vmatpush1.msra.mxu0 0.0
    %686 = vmatprep.subr.mxu0 0.0
    %687 = vmatpush1.msra.mxu0 0.0
    %688 = vmatprep.mubr.f32.mxu0 0.0
    %v689 = vand.u32 %v37, 4294901760
    %690 = vmatmul.mubr.f32.gmra.mrb[0].mxu0 %v689
    %v691 = vpop.f32.mrb[0].mxu0
    %v692 = vadd.f32 %v605, %v691
    %v693 = vpop.f32.mrb[0].mxu0
    %694 = vdwg.mxu0
    %v695 = vld [vmem:[#allocation3 + $0x80] sm:$0xff]
    %v696 = vtanh.pop %v692
    %698 = vset.pattern.permute.xlu0 0
    %699 = vperm.xlu0 %698, %v696
    %v700 = vpop.permute.xlu0 %699
    %v702 = vlaneseq
    %v703 = vshrl.u32 %v702, 7
    %v704 = vsub.s32 0, %v703
    %v705 = vrot.slane %v695, %v704
    %v706 = vmul.f32 %v700, %v705
    %v707 = vadd.f32 %v692, %v706
    %v708 = vtanh.pop %v707
    %710 = vset.pattern.permute.xlu0 1
    %711 = vperm.xlu0 %710, %v708
    %v712 = vpop.permute.xlu0 %711
    %v714 = vlaneseq
    %v715 = vshrl.u32 %v714, 7
    %v716 = vsub.s32 1, %v715
    %v717 = vrot.slane %v695, %v716
    %v718 = vmul.f32 %v712, %v717
    %v719 = vadd.f32 %v707, %v718
    %v720 = vtanh.pop %v719
    %722 = vset.pattern.permute.xlu0 2
    %723 = vperm.xlu0 %722, %v720
    %v724 = vpop.permute.xlu0 %723
    %v726 = vlaneseq
    %v727 = vshrl.u32 %v726, 7
    %v728 = vsub.s32 2, %v727
    %v729 = vrot.slane %v695, %v728
    %v730 = vmul.f32 %v724, %v729
    %v731 = vadd.f32 %v719, %v730
    %v732 = vtanh.pop %v731
    %734 = vset.pattern.permute.xlu0 3
    %735 = vperm.xlu0 %734, %v732
    %v736 = vpop.permute.xlu0 %735
    %v738 = vlaneseq
    %v739 = vshrl.u32 %v738, 7
    %v740 = vsub.s32 3, %v739
    %v741 = vrot.slane %v695, %v740
    %v742 = vmul.f32 %v736, %v741
    %v743 = vadd.f32 %v731, %v742
    %v744 = vtanh.pop %v743
    %746 = vset.pattern.permute.xlu0 4
    %747 = vperm.xlu0 %746, %v744
    %v748 = vpop.permute.xlu0 %747
    %v750 = vlaneseq
    %v751 = vshrl.u32 %v750, 7
    %v752 = vsub.s32 4, %v751
    %v753 = vrot.slane %v695, %v752
    %v754 = vmul.f32 %v748, %v753
    %v755 = vadd.f32 %v743, %v754
    %v756 = vtanh.pop %v755
    %758 = vset.pattern.permute.xlu0 5
    %759 = vperm.xlu0 %758, %v756
    %v760 = vpop.permute.xlu0 %759
    %v762 = vlaneseq
    %v763 = vshrl.u32 %v762, 7
    %v764 = vsub.s32 5, %v763
    %v765 = vrot.slane %v695, %v764
    %v766 = vmul.f32 %v760, %v765
    %v767 = vadd.f32 %v755, %v766
    %v768 = vtanh.pop %v767
    %770 = vset.pattern.permute.xlu0 6
    %771 = vperm.xlu0 %770, %v768
    %v772 = vpop.permute.xlu0 %771
    %v774 = vlaneseq
    %v775 = vshrl.u32 %v774, 7
    %v776 = vsub.s32 6, %v775
    %v777 = vrot.slane %v695, %v776
    %v778 = vmul.f32 %v772, %v777
    %v779 = vadd.f32 %v767, %v778
    %v780 = vtanh.pop %v779
    %782 = vset.pattern.permute.xlu0 7
    %783 = vperm.xlu0 %782, %v780
    %v784 = vpop.permute.xlu0 %783
    %v786 = vlaneseq
    %v787 = vshrl.u32 %v786, 7
    %v788 = vsub.s32 7, %v787
    %v789 = vrot.slane %v695, %v788
    %v790 = vmul.f32 %v784, %v789
    %v791 = vadd.f32 %v779, %v790
    %v792 = vxor.u32 %v791, 2147483648
    %v793 = vmul.f32 %v792, 1.442695
    %v794 = vpow.pop %v793
    %v795 = vadd.f32 %v794, 1.0
    %v796 = vrcp.pop %v795
    %v797 = vmul.f32 1.0, %v796
    %v798 = vmul.f32 %v797, 4.8
    %v799 = vadd.f32 %v798, 8.0
    %v800 = vmax.f32 %v791, 0.0
    %v801 = vld [vmem:[#allocation3 + $0x88] sm:$0xff]
    %v802 = vld [vmem:[#allocation3 + $0x90] sm:$0xff]
    %v803 = vld [vmem:[#allocation3 + $0x98] sm:$0xff]
    %v804 = vld [vmem:[#allocation3 + $0xa0] sm:$0xff]
    %v805 = vld [vmem:[#allocation3 + $0xa8] sm:$0xff]
    %v806 = vld [vmem:[#allocation3 + $0xb0] sm:$0xff]
    %v807 = vld [vmem:[#allocation3 + $0xb8] sm:$0xff]
    %v808 = vld [vmem:[#allocation3 + $0xc0] sm:$0xff]
    %810 = vrot.lane.b32.xlu0 %v800, 64
    %v811 = vpop.permute.xlu0 %810
    %vm812 = vcmask 523264
    %v813 = vsel %vm812, %v811, 0
    %815 = vmatprep.subr.mxu0 0.0
    %v816 = vand.u32 %v801, 4294901760
    %817 = vmatpush1.msra.mxu0 %v816
    %818 = vmatprep.subr.mxu0 0.0
    %v819 = vand.u32 %v802, 4294901760
    %820 = vmatpush1.msra.mxu0 %v819
    %821 = vmatprep.subr.mxu0 0.0
    %v822 = vand.u32 %v803, 4294901760
    %823 = vmatpush1.msra.mxu0 %v822
    %824 = vmatprep.subr.mxu0 0.0
    %v825 = vand.u32 %v804, 4294901760
    %826 = vmatpush1.msra.mxu0 %v825
    %827 = vmatprep.subr.mxu0 0.0
    %v828 = vand.u32 %v805, 4294901760
    %829 = vmatpush1.msra.mxu0 %v828
    %830 = vmatprep.subr.mxu0 0.0
    %v831 = vand.u32 %v806, 4294901760
    %832 = vmatpush1.msra.mxu0 %v831
    %833 = vmatprep.subr.mxu0 0.0
    %v834 = vand.u32 %v807, 4294901760
    %835 = vmatpush1.msra.mxu0 %v834
    %836 = vmatprep.subr.mxu0 0.0
    %v837 = vand.u32 %v808, 4294901760
    %838 = vmatpush1.msra.mxu0 %v837
    %839 = vmatprep.subr.mxu0 0.0
    %840 = vmatpush1.msra.mxu0 0.0
    %841 = vmatprep.subr.mxu0 0.0
    %842 = vmatpush1.msra.mxu0 0.0
    %843 = vmatprep.subr.mxu0 0.0
    %844 = vmatpush1.msra.mxu0 0.0
    %845 = vmatprep.subr.mxu0 0.0
    %846 = vmatpush1.msra.mxu0 0.0
    %847 = vmatprep.subr.mxu0 0.0
    %848 = vmatpush1.msra.mxu0 0.0
    %849 = vmatprep.subr.mxu0 0.0
    %850 = vmatpush1.msra.mxu0 0.0
    %851 = vmatprep.subr.mxu0 0.0
    %852 = vmatpush1.msra.mxu0 0.0
    %853 = vmatprep.subr.mxu0 0.0
    %854 = vmatpush1.msra.mxu0 0.0
    %855 = vmatprep.subr.mxu0 0.0
    %856 = vmatpush1.msra.mxu0 0.0
    %857 = vmatprep.subr.mxu0 0.0
    %858 = vmatpush1.msra.mxu0 0.0
    %859 = vmatprep.subr.mxu0 0.0
    %860 = vmatpush1.msra.mxu0 0.0
    %861 = vmatprep.subr.mxu0 0.0
    %862 = vmatpush1.msra.mxu0 0.0
    %863 = vmatprep.subr.mxu0 0.0
    %864 = vmatpush1.msra.mxu0 0.0
    %865 = vmatprep.subr.mxu0 0.0
    %866 = vmatpush1.msra.mxu0 0.0
    %867 = vmatprep.subr.mxu0 0.0
    %868 = vmatpush1.msra.mxu0 0.0
    %869 = vmatprep.subr.mxu0 0.0
    %870 = vmatpush1.msra.mxu0 0.0
    %871 = vmatprep.subr.mxu0 0.0
    %872 = vmatpush1.msra.mxu0 0.0
    %873 = vmatprep.subr.mxu0 0.0
    %874 = vmatpush1.msra.mxu0 0.0
    %875 = vmatprep.subr.mxu0 0.0
    %876 = vmatpush1.msra.mxu0 0.0
    %877 = vmatprep.subr.mxu0 0.0
    %878 = vmatpush1.msra.mxu0 0.0
    %879 = vmatprep.subr.mxu0 0.0
    %880 = vmatpush1.msra.mxu0 0.0
    %881 = vmatprep.subr.mxu0 0.0
    %882 = vmatpush1.msra.mxu0 0.0
    %883 = vmatprep.subr.mxu0 0.0
    %884 = vmatpush1.msra.mxu0 0.0
    %885 = vmatprep.subr.mxu0 0.0
    %886 = vmatpush1.msra.mxu0 0.0
    %887 = vmatprep.mubr.f32.mxu0 0.0
    %v888 = vand.u32 %v813, 4294901760
    %v889 = vsub.f32 %v813, %v888
    %v890 = vand.u32 %v889, 4294901760
    %v891 = vsub.f32 %v889, %v890
    %v892 = vand.u32 %v891, 4294901760
    %893 = vmatmul.mubr.f32.gmra.mrb[0].mxu0 %v892
    %v894 = vpop.f32.mrb[0].mxu0
    %v895 = vadd.f32 0.0, %v894
    %v896 = vpop.f32.mrb[0].mxu0
    %897 = vdwg.mxu0
    %898 = vmatprep.subr.mxu0 0.0
    %v899 = vand.u32 %v801, 4294901760
    %v900 = vsub.f32 %v801, %v899
    %v901 = vand.u32 %v900, 4294901760
    %v902 = vsub.f32 %v900, %v901
    %v903 = vand.u32 %v902, 4294901760
    %904 = vmatpush1.msra.mxu0 %v903
    %905 = vmatprep.subr.mxu0 0.0
    %v906 = vand.u32 %v802, 4294901760
    %v907 = vsub.f32 %v802, %v906
    %v908 = vand.u32 %v907, 4294901760
    %v909 = vsub.f32 %v907, %v908
    %v910 = vand.u32 %v909, 4294901760
    %911 = vmatpush1.msra.mxu0 %v910
    %912 = vmatprep.subr.mxu0 0.0
    %v913 = vand.u32 %v803, 4294901760
    %v914 = vsub.f32 %v803, %v913
    %v915 = vand.u32 %v914, 4294901760
    %v916 = vsub.f32 %v914, %v915
    %v917 = vand.u32 %v916, 4294901760
    %918 = vmatpush1.msra.mxu0 %v917
    %919 = vmatprep.subr.mxu0 0.0
    %v920 = vand.u32 %v804, 4294901760
    %v921 = vsub.f32 %v804, %v920
    %v922 = vand.u32 %v921, 4294901760
    %v923 = vsub.f32 %v921, %v922
    %v924 = vand.u32 %v923, 4294901760
    %925 = vmatpush1.msra.mxu0 %v924
    %926 = vmatprep.subr.mxu0 0.0
    %v927 = vand.u32 %v805, 4294901760
    %v928 = vsub.f32 %v805, %v927
    %v929 = vand.u32 %v928, 4294901760
    %v930 = vsub.f32 %v928, %v929
    %v931 = vand.u32 %v930, 4294901760
    %932 = vmatpush1.msra.mxu0 %v931
    %933 = vmatprep.subr.mxu0 0.0
    %v934 = vand.u32 %v806, 4294901760
    %v935 = vsub.f32 %v806, %v934
    %v936 = vand.u32 %v935, 4294901760
    %v937 = vsub.f32 %v935, %v936
    %v938 = vand.u32 %v937, 4294901760
    %939 = vmatpush1.msra.mxu0 %v938
    %940 = vmatprep.subr.mxu0 0.0
    %v941 = vand.u32 %v807, 4294901760
    %v942 = vsub.f32 %v807, %v941
    %v943 = vand.u32 %v942, 4294901760
    %v944 = vsub.f32 %v942, %v943
    %v945 = vand.u32 %v944, 4294901760
    %946 = vmatpush1.msra.mxu0 %v945
    %947 = vmatprep.subr.mxu0 0.0
    %v948 = vand.u32 %v808, 4294901760
    %v949 = vsub.f32 %v808, %v948
    %v950 = vand.u32 %v949, 4294901760
    %v951 = vsub.f32 %v949, %v950
    %v952 = vand.u32 %v951, 4294901760
    %953 = vmatpush1.msra.mxu0 %v952
    %954 = vmatprep.subr.mxu0 0.0
    %955 = vmatpush1.msra.mxu0 0.0
    %956 = vmatprep.subr.mxu0 0.0
    %957 = vmatpush1.msra.mxu0 0.0
    %958 = vmatprep.subr.mxu0 0.0
    %959 = vmatpush1.msra.mxu0 0.0
    %960 = vmatprep.subr.mxu0 0.0
    %961 = vmatpush1.msra.mxu0 0.0
    %962 = vmatprep.subr.mxu0 0.0
    %963 = vmatpush1.msra.mxu0 0.0
    %964 = vmatprep.subr.mxu0 0.0
    %965 = vmatpush1.msra.mxu0 0.0
    %966 = vmatprep.subr.mxu0 0.0
    %967 = vmatpush1.msra.mxu0 0.0
    %968 = vmatprep.subr.mxu0 0.0
    %969 = vmatpush1.msra.mxu0 0.0
    %970 = vmatprep.subr.mxu0 0.0
    %971 = vmatpush1.msra.mxu0 0.0
    %972 = vmatprep.subr.mxu0 0.0
    %973 = vmatpush1.msra.mxu0 0.0
    %974 = vmatprep.subr.mxu0 0.0
    %975 = vmatpush1.msra.mxu0 0.0
    %976 = vmatprep.subr.mxu0 0.0
    %977 = vmatpush1.msra.mxu0 0.0
    %978 = vmatprep.subr.mxu0 0.0
    %979 = vmatpush1.msra.mxu0 0.0
    %980 = vmatprep.subr.mxu0 0.0
    %981 = vmatpush1.msra.mxu0 0.0
    %982 = vmatprep.subr.mxu0 0.0
    %983 = vmatpush1.msra.mxu0 0.0
    %984 = vmatprep.subr.mxu0 0.0
    %985 = vmatpush1.msra.mxu0 0.0
    %986 = vmatprep.subr.mxu0 0.0
    %987 = vmatpush1.msra.mxu0 0.0
    %988 = vmatprep.subr.mxu0 0.0
    %989 = vmatpush1.msra.mxu0 0.0
    %990 = vmatprep.subr.mxu0 0.0
    %991 = vmatpush1.msra.mxu0 0.0
    %992 = vmatprep.subr.mxu0 0.0
    %993 = vmatpush1.msra.mxu0 0.0
    %994 = vmatprep.subr.mxu0 0.0
    %995 = vmatpush1.msra.mxu0 0.0
    %996 = vmatprep.subr.mxu0 0.0
    %997 = vmatpush1.msra.mxu0 0.0
    %998 = vmatprep.subr.mxu0 0.0
    %999 = vmatpush1.msra.mxu0 0.0
    %1000 = vmatprep.subr.mxu0 0.0
    %1001 = vmatpush1.msra.mxu0 0.0
    %1002 = vmatprep.mubr.f32.mxu0 0.0
    %v1003 = vand.u32 %v813, 4294901760
    %1004 = vmatmul.mubr.f32.gmra.mrb[0].mxu0 %v1003
    %v1005 = vpop.f32.mrb[0].mxu0
    %v1006 = vadd.f32 %v895, %v1005
    %v1007 = vpop.f32.mrb[0].mxu0
    %1008 = vdwg.mxu0
    %1009 = vmatprep.subr.mxu0 0.0
    %v1010 = vand.u32 %v801, 4294901760
    %v1011 = vsub.f32 %v801, %v1010
    %1012 = vmatpush1.msra.mxu0 %v1011
    %1013 = vmatprep.subr.mxu0 0.0
    %v1014 = vand.u32 %v802, 4294901760
    %v1015 = vsub.f32 %v802, %v1014
    %1016 = vmatpush1.msra.mxu0 %v1015
    %1017 = vmatprep.subr.mxu0 0.0
    %v1018 = vand.u32 %v803, 4294901760
    %v1019 = vsub.f32 %v803, %v1018
    %1020 = vmatpush1.msra.mxu0 %v1019
    %1021 = vmatprep.subr.mxu0 0.0
    %v1022 = vand.u32 %v804, 4294901760
    %v1023 = vsub.f32 %v804, %v1022
    %1024 = vmatpush1.msra.mxu0 %v1023
    %1025 = vmatprep.subr.mxu0 0.0
    %v1026 = vand.u32 %v805, 4294901760
    %v1027 = vsub.f32 %v805, %v1026
    %1028 = vmatpush1.msra.mxu0 %v1027
    %1029 = vmatprep.subr.mxu0 0.0
    %v1030 = vand.u32 %v806, 4294901760
    %v1031 = vsub.f32 %v806, %v1030
    %1032 = vmatpush1.msra.mxu0 %v1031
    %1033 = vmatprep.subr.mxu0 0.0
    %v1034 = vand.u32 %v807, 4294901760
    %v1035 = vsub.f32 %v807, %v1034
    %1036 = vmatpush1.msra.mxu0 %v1035
    %1037 = vmatprep.subr.mxu0 0.0
    %v1038 = vand.u32 %v808, 4294901760
    %v1039 = vsub.f32 %v808, %v1038
    %1040 = vmatpush1.msra.mxu0 %v1039
    %1041 = vmatprep.subr.mxu0 0.0
    %1042 = vmatpush1.msra.mxu0 0.0
    %1043 = vmatprep.subr.mxu0 0.0
    %1044 = vmatpush1.msra.mxu0 0.0
    %1045 = vmatprep.subr.mxu0 0.0
    %1046 = vmatpush1.msra.mxu0 0.0
    %1047 = vmatprep.subr.mxu0 0.0
    %1048 = vmatpush1.msra.mxu0 0.0
    %1049 = vmatprep.subr.mxu0 0.0
    %1050 = vmatpush1.msra.mxu0 0.0
    %1051 = vmatprep.subr.mxu0 0.0
    %1052 = vmatpush1.msra.mxu0 0.0
    %1053 = vmatprep.subr.mxu0 0.0
    %1054 = vmatpush1.msra.mxu0 0.0
    %1055 = vmatprep.subr.mxu0 0.0
    %1056 = vmatpush1.msra.mxu0 0.0
    %1057 = vmatprep.subr.mxu0 0.0
    %1058 = vmatpush1.msra.mxu0 0.0
    %1059 = vmatprep.subr.mxu0 0.0
    %1060 = vmatpush1.msra.mxu0 0.0
    %1061 = vmatprep.subr.mxu0 0.0
    %1062 = vmatpush1.msra.mxu0 0.0
    %1063 = vmatprep.subr.mxu0 0.0
    %1064 = vmatpush1.msra.mxu0 0.0
    %1065 = vmatprep.subr.mxu0 0.0
    %1066 = vmatpush1.msra.mxu0 0.0
    %1067 = vmatprep.subr.mxu0 0.0
    %1068 = vmatpush1.msra.mxu0 0.0
    %1069 = vmatprep.subr.mxu0 0.0
    %1070 = vmatpush1.msra.mxu0 0.0
    %1071 = vmatprep.subr.mxu0 0.0
    %1072 = vmatpush1.msra.mxu0 0.0
    %1073 = vmatprep.subr.mxu0 0.0
    %1074 = vmatpush1.msra.mxu0 0.0
    %1075 = vmatprep.subr.mxu0 0.0
    %1076 = vmatpush1.msra.mxu0 0.0
    %1077 = vmatprep.subr.mxu0 0.0
    %1078 = vmatpush1.msra.mxu0 0.0
    %1079 = vmatprep.subr.mxu0 0.0
    %1080 = vmatpush1.msra.mxu0 0.0
    %1081 = vmatprep.subr.mxu0 0.0
    %1082 = vmatpush1.msra.mxu0 0.0
    %1083 = vmatprep.subr.mxu0 0.0
    %1084 = vmatpush1.msra.mxu0 0.0
    %1085 = vmatprep.subr.mxu0 0.0
    %1086 = vmatpush1.msra.mxu0 0.0
    %1087 = vmatprep.subr.mxu0 0.0
    %1088 = vmatpush1.msra.mxu0 0.0
    %1089 = vmatprep.mubr.f32.mxu0 0.0
    %v1090 = vand.u32 %v813, 4294901760
    %v1091 = vsub.f32 %v813, %v1090
    %1092 = vmatmul.mubr.f32.gmra.mrb[0].mxu0 %v1091
    %v1093 = vpop.f32.mrb[0].mxu0
    %v1094 = vadd.f32 %v1006, %v1093
    %v1095 = vpop.f32.mrb[0].mxu0
    %1096 = vdwg.mxu0
    %1097 = vmatprep.subr.mxu0 0.0
    %v1098 = vand.u32 %v801, 4294901760
    %1099 = vmatpush1.msra.mxu0 %v1098
    %1100 = vmatprep.subr.mxu0 0.0
    %v1101 = vand.u32 %v802, 4294901760
    %1102 = vmatpush1.msra.mxu0 %v1101
    %1103 = vmatprep.subr.mxu0 0.0
    %v1104 = vand.u32 %v803, 4294901760
    %1105 = vmatpush1.msra.mxu0 %v1104
    %1106 = vmatprep.subr.mxu0 0.0
    %v1107 = vand.u32 %v804, 4294901760
    %1108 = vmatpush1.msra.mxu0 %v1107
    %1109 = vmatprep.subr.mxu0 0.0
    %v1110 = vand.u32 %v805, 4294901760
    %1111 = vmatpush1.msra.mxu0 %v1110
    %1112 = vmatprep.subr.mxu0 0.0
    %v1113 = vand.u32 %v806, 4294901760
    %1114 = vmatpush1.msra.mxu0 %v1113
    %1115 = vmatprep.subr.mxu0 0.0
    %v1116 = vand.u32 %v807, 4294901760
    %1117 = vmatpush1.msra.mxu0 %v1116
    %1118 = vmatprep.subr.mxu0 0.0
    %v1119 = vand.u32 %v808, 4294901760
    %1120 = vmatpush1.msra.mxu0 %v1119
    %1121 = vmatprep.subr.mxu0 0.0
    %1122 = vmatpush1.msra.mxu0 0.0
    %1123 = vmatprep.subr.mxu0 0.0
    %1124 = vmatpush1.msra.mxu0 0.0
    %1125 = vmatprep.subr.mxu0 0.0
    %1126 = vmatpush1.msra.mxu0 0.0
    %1127 = vmatprep.subr.mxu0 0.0
    %1128 = vmatpush1.msra.mxu0 0.0
    %1129 = vmatprep.subr.mxu0 0.0
    %1130 = vmatpush1.msra.mxu0 0.0
    %1131 = vmatprep.subr.mxu0 0.0
    %1132 = vmatpush1.msra.mxu0 0.0
    %1133 = vmatprep.subr.mxu0 0.0
    %1134 = vmatpush1.msra.mxu0 0.0
    %1135 = vmatprep.subr.mxu0 0.0
    %1136 = vmatpush1.msra.mxu0 0.0
    %1137 = vmatprep.subr.mxu0 0.0
    %1138 = vmatpush1.msra.mxu0 0.0
    %1139 = vmatprep.subr.mxu0 0.0
    %1140 = vmatpush1.msra.mxu0 0.0
    %1141 = vmatprep.subr.mxu0 0.0
    %1142 = vmatpush1.msra.mxu0 0.0
    %1143 = vmatprep.subr.mxu0 0.0
    %1144 = vmatpush1.msra.mxu0 0.0
    %1145 = vmatprep.subr.mxu0 0.0
    %1146 = vmatpush1.msra.mxu0 0.0
    %1147 = vmatprep.subr.mxu0 0.0
    %1148 = vmatpush1.msra.mxu0 0.0
    %1149 = vmatprep.subr.mxu0 0.0
    %1150 = vmatpush1.msra.mxu0 0.0
    %1151 = vmatprep.subr.mxu0 0.0
    %1152 = vmatpush1.msra.mxu0 0.0
    %1153 = vmatprep.subr.mxu0 0.0
    %1154 = vmatpush1.msra.mxu0 0.0
    %1155 = vmatprep.subr.mxu0 0.0
    %1156 = vmatpush1.msra.mxu0 0.0
    %1157 = vmatprep.subr.mxu0 0.0
    %1158 = vmatpush1.msra.mxu0 0.0
    %1159 = vmatprep.subr.mxu0 0.0
    %1160 = vmatpush1.msra.mxu0 0.0
    %1161 = vmatprep.subr.mxu0 0.0
    %1162 = vmatpush1.msra.mxu0 0.0
    %1163 = vmatprep.subr.mxu0 0.0
    %1164 = vmatpush1.msra.mxu0 0.0
    %1165 = vmatprep.subr.mxu0 0.0
    %1166 = vmatpush1.msra.mxu0 0.0
    %1167 = vmatprep.subr.mxu0 0.0
    %1168 = vmatpush1.msra.mxu0 0.0
    %1169 = vmatprep.mubr.f32.mxu0 0.0
    %v1170 = vand.u32 %v813, 4294901760
    %v1171 = vsub.f32 %v813, %v1170
    %v1172 = vand.u32 %v1171, 4294901760
    %1173 = vmatmul.mubr.f32.gmra.mrb[0].mxu0 %v1172
    %v1174 = vpop.f32.mrb[0].mxu0
    %v1175 = vadd.f32 %v1094, %v1174
    %v1176 = vpop.f32.mrb[0].mxu0
    %1177 = vdwg.mxu0
    %1178 = vmatprep.subr.mxu0 0.0
    %v1179 = vand.u32 %v801, 4294901760
    %v1180 = vsub.f32 %v801, %v1179
    %v1181 = vand.u32 %v1180, 4294901760
    %1182 = vmatpush1.msra.mxu0 %v1181
    %1183 = vmatprep.subr.mxu0 0.0
    %v1184 = vand.u32 %v802, 4294901760
    %v1185 = vsub.f32 %v802, %v1184
    %v1186 = vand.u32 %v1185, 4294901760
    %1187 = vmatpush1.msra.mxu0 %v1186
    %1188 = vmatprep.subr.mxu0 0.0
    %v1189 = vand.u32 %v803, 4294901760
    %v1190 = vsub.f32 %v803, %v1189
    %v1191 = vand.u32 %v1190, 4294901760
    %1192 = vmatpush1.msra.mxu0 %v1191
    %1193 = vmatprep.subr.mxu0 0.0
    %v1194 = vand.u32 %v804, 4294901760
    %v1195 = vsub.f32 %v804, %v1194
    %v1196 = vand.u32 %v1195, 4294901760
    %1197 = vmatpush1.msra.mxu0 %v1196
    %1198 = vmatprep.subr.mxu0 0.0
    %v1199 = vand.u32 %v805, 4294901760
    %v1200 = vsub.f32 %v805, %v1199
    %v1201 = vand.u32 %v1200, 4294901760
    %1202 = vmatpush1.msra.mxu0 %v1201
    %1203 = vmatprep.subr.mxu0 0.0
    %v1204 = vand.u32 %v806, 4294901760
    %v1205 = vsub.f32 %v806, %v1204
    %v1206 = vand.u32 %v1205, 4294901760
    %1207 = vmatpush1.msra.mxu0 %v1206
    %1208 = vmatprep.subr.mxu0 0.0
    %v1209 = vand.u32 %v807, 4294901760
    %v1210 = vsub.f32 %v807, %v1209
    %v1211 = vand.u32 %v1210, 4294901760
    %1212 = vmatpush1.msra.mxu0 %v1211
    %1213 = vmatprep.subr.mxu0 0.0
    %v1214 = vand.u32 %v808, 4294901760
    %v1215 = vsub.f32 %v808, %v1214
    %v1216 = vand.u32 %v1215, 4294901760
    %1217 = vmatpush1.msra.mxu0 %v1216
    %1218 = vmatprep.subr.mxu0 0.0
    %1219 = vmatpush1.msra.mxu0 0.0
    %1220 = vmatprep.subr.mxu0 0.0
    %1221 = vmatpush1.msra.mxu0 0.0
    %1222 = vmatprep.subr.mxu0 0.0
    %1223 = vmatpush1.msra.mxu0 0.0
    %1224 = vmatprep.subr.mxu0 0.0
    %1225 = vmatpush1.msra.mxu0 0.0
    %1226 = vmatprep.subr.mxu0 0.0
    %1227 = vmatpush1.msra.mxu0 0.0
    %1228 = vmatprep.subr.mxu0 0.0
    %1229 = vmatpush1.msra.mxu0 0.0
    %1230 = vmatprep.subr.mxu0 0.0
    %1231 = vmatpush1.msra.mxu0 0.0
    %1232 = vmatprep.subr.mxu0 0.0
    %1233 = vmatpush1.msra.mxu0 0.0
    %1234 = vmatprep.subr.mxu0 0.0
    %1235 = vmatpush1.msra.mxu0 0.0
    %1236 = vmatprep.subr.mxu0 0.0
    %1237 = vmatpush1.msra.mxu0 0.0
    %1238 = vmatprep.subr.mxu0 0.0
    %1239 = vmatpush1.msra.mxu0 0.0
    %1240 = vmatprep.subr.mxu0 0.0
    %1241 = vmatpush1.msra.mxu0 0.0
    %1242 = vmatprep.subr.mxu0 0.0
    %1243 = vmatpush1.msra.mxu0 0.0
    %1244 = vmatprep.subr.mxu0 0.0
    %1245 = vmatpush1.msra.mxu0 0.0
    %1246 = vmatprep.subr.mxu0 0.0
    %1247 = vmatpush1.msra.mxu0 0.0
    %1248 = vmatprep.subr.mxu0 0.0
    %1249 = vmatpush1.msra.mxu0 0.0
    %1250 = vmatprep.subr.mxu0 0.0
    %1251 = vmatpush1.msra.mxu0 0.0
    %1252 = vmatprep.subr.mxu0 0.0
    %1253 = vmatpush1.msra.mxu0 0.0
    %1254 = vmatprep.subr.mxu0 0.0
    %1255 = vmatpush1.msra.mxu0 0.0
    %1256 = vmatprep.subr.mxu0 0.0
    %1257 = vmatpush1.msra.mxu0 0.0
    %1258 = vmatprep.subr.mxu0 0.0
    %1259 = vmatpush1.msra.mxu0 0.0
    %1260 = vmatprep.subr.mxu0 0.0
    %1261 = vmatpush1.msra.mxu0 0.0
    %1262 = vmatprep.subr.mxu0 0.0
    %1263 = vmatpush1.msra.mxu0 0.0
    %1264 = vmatprep.subr.mxu0 0.0
    %1265 = vmatpush1.msra.mxu0 0.0
    %1266 = vmatprep.mubr.f32.mxu0 0.0
    %v1267 = vand.u32 %v813, 4294901760
    %1268 = vmatmul.mubr.f32.gmra.mrb[0].mxu0 %v1267
    %v1269 = vpop.f32.mrb[0].mxu0
    %v1270 = vadd.f32 %v1175, %v1269
    %v1271 = vpop.f32.mrb[0].mxu0
    %1272 = vdwg.mxu0
    %1273 = vmatprep.subr.mxu0 0.0
    %v1274 = vand.u32 %v801, 4294901760
    %1275 = vmatpush1.msra.mxu0 %v1274
    %1276 = vmatprep.subr.mxu0 0.0
    %v1277 = vand.u32 %v802, 4294901760
    %1278 = vmatpush1.msra.mxu0 %v1277
    %1279 = vmatprep.subr.mxu0 0.0
    %v1280 = vand.u32 %v803, 4294901760
    %1281 = vmatpush1.msra.mxu0 %v1280
    %1282 = vmatprep.subr.mxu0 0.0
    %v1283 = vand.u32 %v804, 4294901760
    %1284 = vmatpush1.msra.mxu0 %v1283
    %1285 = vmatprep.subr.mxu0 0.0
    %v1286 = vand.u32 %v805, 4294901760
    %1287 = vmatpush1.msra.mxu0 %v1286
    %1288 = vmatprep.subr.mxu0 0.0
    %v1289 = vand.u32 %v806, 4294901760
    %1290 = vmatpush1.msra.mxu0 %v1289
    %1291 = vmatprep.subr.mxu0 0.0
    %v1292 = vand.u32 %v807, 4294901760
    %1293 = vmatpush1.msra.mxu0 %v1292
    %1294 = vmatprep.subr.mxu0 0.0
    %v1295 = vand.u32 %v808, 4294901760
    %1296 = vmatpush1.msra.mxu0 %v1295
    %1297 = vmatprep.subr.mxu0 0.0
    %1298 = vmatpush1.msra.mxu0 0.0
    %1299 = vmatprep.subr.mxu0 0.0
    %1300 = vmatpush1.msra.mxu0 0.0
    %1301 = vmatprep.subr.mxu0 0.0
    %1302 = vmatpush1.msra.mxu0 0.0
    %1303 = vmatprep.subr.mxu0 0.0
    %1304 = vmatpush1.msra.mxu0 0.0
    %1305 = vmatprep.subr.mxu0 0.0
    %1306 = vmatpush1.msra.mxu0 0.0
    %1307 = vmatprep.subr.mxu0 0.0
    %1308 = vmatpush1.msra.mxu0 0.0
    %1309 = vmatprep.subr.mxu0 0.0
    %1310 = vmatpush1.msra.mxu0 0.0
    %1311 = vmatprep.subr.mxu0 0.0
    %1312 = vmatpush1.msra.mxu0 0.0
    %1313 = vmatprep.subr.mxu0 0.0
    %1314 = vmatpush1.msra.mxu0 0.0
    %1315 = vmatprep.subr.mxu0 0.0
    %1316 = vmatpush1.msra.mxu0 0.0
    %1317 = vmatprep.subr.mxu0 0.0
    %1318 = vmatpush1.msra.mxu0 0.0
    %1319 = vmatprep.subr.mxu0 0.0
    %1320 = vmatpush1.msra.mxu0 0.0
    %1321 = vmatprep.subr.mxu0 0.0
    %1322 = vmatpush1.msra.mxu0 0.0
    %1323 = vmatprep.subr.mxu0 0.0
    %1324 = vmatpush1.msra.mxu0 0.0
    %1325 = vmatprep.subr.mxu0 0.0
    %1326 = vmatpush1.msra.mxu0 0.0
    %1327 = vmatprep.subr.mxu0 0.0
    %1328 = vmatpush1.msra.mxu0 0.0
    %1329 = vmatprep.subr.mxu0 0.0
    %1330 = vmatpush1.msra.mxu0 0.0
    %1331 = vmatprep.subr.mxu0 0.0
    %1332 = vmatpush1.msra.mxu0 0.0
    %1333 = vmatprep.subr.mxu0 0.0
    %1334 = vmatpush1.msra.mxu0 0.0
    %1335 = vmatprep.subr.mxu0 0.0
    %1336 = vmatpush1.msra.mxu0 0.0
    %1337 = vmatprep.subr.mxu0 0.0
    %1338 = vmatpush1.msra.mxu0 0.0
    %1339 = vmatprep.subr.mxu0 0.0
    %1340 = vmatpush1.msra.mxu0 0.0
    %1341 = vmatprep.subr.mxu0 0.0
    %1342 = vmatpush1.msra.mxu0 0.0
    %1343 = vmatprep.subr.mxu0 0.0
    %1344 = vmatpush1.msra.mxu0 0.0
    %1345 = vmatprep.mubr.f32.mxu0 0.0
    %v1346 = vand.u32 %v813, 4294901760
    %1347 = vmatmul.mubr.f32.gmra.mrb[0].mxu0 %v1346
    %v1348 = vpop.f32.mrb[0].mxu0
    %v1349 = vadd.f32 %v1270, %v1348
    %v1350 = vpop.f32.mrb[0].mxu0
    %1351 = vdwg.mxu0
    %v1352 = vld [vmem:[#allocation3 + $0xc8] sm:$0x1]
    %v1353 = vlaneseq
    %v1354 = vshrl.u32 %v1353, 7
    %v1355 = vsub.s32 0, %v1354
    %v1356 = vrot.slane %v1352, %v1355
    %v1357 = vadd.f32 %v1349, %v1356
    %v1358 = vxor.u32 %v1357, 2147483648
    %v1359 = vmul.f32 %v1358, 1.442695
    %v1360 = vpow.pop %v1359
    %v1361 = vadd.f32 %v1360, 1.0
    %v1362 = vrcp.pop %v1361
    %v1363 = vmul.f32 1.0, %v1362
    %1365 = vrot.lane.b32.xlu0 %v799, 112
    %v1366 = vpop.permute.xlu0 %1365
    %1369 = vrot.lane.b32.xlu0 %v791, 122
    %v1370 = vpop.permute.xlu0 %1369
    %1373 = vrot.lane.b32.xlu0 %v1363, 10
    %v1374 = vpop.permute.xlu0 %1373
    %vm1376 = vcmask 15360
    %v1377 = vsel %vm1376, %v1366, %v1370
    %vm1378 = vcmask 80896
    %v1379 = vsel %vm1378, %v1377, %v1374
    %vm1380 = vcmask 89088
    %v1381 = vsel %vm1380, %v1379, 0.0
    %1382 = vst [vmem:[%s3] sm:$0xff] %v1381
    %1383 = vrot.lane.b32.xlu0 %v791, 124
    %v1384 = vpop.permute.xlu0 %1383
    %vm1386 = vcmask 97312
    %1387 = vst.msk [vmem:[#allocation2] sm:$0xff] %vm1386, %v1384
    %1389 = vrot.lane.b32.xlu0 %v34, 12
    %v1390 = vpop.permute.xlu0 %1389
    %vm1392 = vcmask 130144
    %1393 = vst.msk [vmem:[#allocation2] sm:$0xff] %vm1392, %v1390
    %vm1394 = vcmask 146560
    %1395 = vst.msk [vmem:[#allocation2] sm:$0xff] %vm1394, %v799
    // Predicated region
    $region22: #{_rollout_impl.1} parent=1 // pred_check
      _
    $region23: #{_rollout_impl.1} parent=1 // pred_check_branch
      %1397 = sbr.rel (0) target = $region25
    $region24: #{_rollout_impl.1} parent=1 // pred_region
      _
    $region25: #{_rollout_impl.1} parent=1 // pred_fallthru
      _
    // Predicated region
    $region26: #{_rollout_impl.1} parent=1 // pred_check
      _
    $region27: #{_rollout_impl.1} parent=1 // pred_check_branch
      %1399 = sbr.rel (0) target = $region29
    $region28: #{_rollout_impl.1} parent=1 // pred_region
      _
    $region29: #{_rollout_impl.1} parent=1 // pred_fallthru
      _
    %1400 = vsyncpa [#allocation4], 1

</llo_original>
